<compile_context>
chip_gen: v5e
topology: v5e:2x2
jax: 0.10.0
libtpu: 0.0.40
codegen_flags: <defaults>
</compile_context>

<pallas_src>
import functools
import math

import jax
import jax.numpy as jnp
from jax.experimental import pallas as pl
from jax.experimental.pallas import tpu as pltpu


def _round_up(x, m):
    return -(-x // m) * m


def _fold_factor(out_dim, max_fold=16):
    """Smallest f with f*out_dim % 128 == 0 (capped); 1 disables folding."""
    f = 128 // math.gcd(out_dim, 128)
    return f if f <= max_fold else 1


def _mlp_kernel(*refs, n_layers, compute_dtype):
    """refs = (x, w1, b1, ..., wN, bN, out).  Each layer: sigmoid(h @ W + b)."""
    x_ref, o_ref = refs[0], refs[-1]
    h = x_ref[...]
    z = None
    for layer in range(n_layers):
        w = refs[1 + 2 * layer][...]
        b = refs[2 + 2 * layer][...]
        z = jnp.dot(h, w, preferred_element_type=jnp.float32)   # MXU, f32 accumulate
        z = jax.nn.sigmoid(z + b)                                # bias + sigmoid in f32
        if layer + 1 < n_layers:
            h = z.astype(compute_dtype)                          # bf16 into next MXU pass
    o_ref[...] = z.astype(o_ref.dtype)


@functools.partial(jax.jit, static_argnames=("batch_tile", "use_bf16"))
def mlp_forward(x, params, batch_tile=512, use_bf16=True):
    """Run the fused MLP kernel.  x: (B, input_dim) f32; params: [(W(in,out), b(1,out))]."""
    B, in_dim = x.shape
    out_dim = params[-1][0].shape[1]
    n_layers = len(params)

    fold = _fold_factor(out_dim)                 # 8 for out_dim=16
    compute_dtype = jnp.bfloat16 if use_bf16 else jnp.float32

    # Batch tile: multiple of 8*fold so the folded block keeps 8-sublane alignment.
    row_align = 8 * fold
    bt = min(batch_tile, B)
    bt = max(row_align, _round_up(bt, row_align))
    B_pad = _round_up(B, bt)
    if B_pad != B:
        x = jnp.pad(x, ((0, B_pad - B), (0, 0)))

    # Fold 8 batch rows into the lane dim (metadata-only reshape outside the kernel).
    xf = x.reshape(B_pad // fold, fold * in_dim).astype(compute_dtype)
    btf = bt // fold
    grid = (B_pad // bt,)

    in_specs = [pl.BlockSpec((btf, fold * in_dim), lambda i: (i, 0))]
    flat_args = [xf]
    eye = jnp.eye(fold, dtype=jnp.float32)
    for (w, b) in params:
        if fold > 1:
            wf = jnp.kron(eye, w)                # block-diagonal: acts per folded row group
            bf = jnp.tile(b, (1, fold))
        else:
            wf, bf = w, b
        wf = wf.astype(compute_dtype)
        bf = bf.astype(jnp.float32)
        # Constant index_map -> fetched once, resident in VMEM for all grid steps.
        in_specs.append(pl.BlockSpec(wf.shape, lambda i: (0, 0)))
        in_specs.append(pl.BlockSpec(bf.shape, lambda i: (0, 0)))
        flat_args.extend([wf, bf])

    out_cols = fold * out_dim                    # 128 for out_dim=16 -> lane-dense stores
    out_spec = pl.BlockSpec((btf, out_cols), lambda i: (i, 0))
    out_shape = jax.ShapeDtypeStruct((B_pad // fold, out_cols), jnp.float32)

    kernel = functools.partial(_mlp_kernel, n_layers=n_layers, compute_dtype=compute_dtype)
    out = pl.pallas_call(
        kernel,
        out_shape=out_shape,
        grid=grid,
        in_specs=in_specs,
        out_specs=out_spec,
        compiler_params=pltpu.CompilerParams(dimension_semantics=("parallel",)),
    )(*flat_args)

    # Row-major unfold (free) + drop batch padding.
    out = out.reshape(B_pad, out_dim)
    return out[:B]
    # TODO(synk): if out_dim needs fold > 16 (e.g. out_dim=10), folding is skipped and
    # the output store falls back to masked (narrow) writes.


def init_params(key, input_dim, first_hidden_layer, second_hidden_layer, output_dim):
    """PyTorch-style uniform(+-1/sqrt(fan_in)) init; W stored (in, out), b (1, out)."""
    dims = [input_dim, first_hidden_layer]
    if second_hidden_layer != 0:
        dims.append(second_hidden_layer)
    dims.append(output_dim)

    params = []
    for fan_in, fan_out in zip(dims[:-1], dims[1:]):
        key, kw, kb = jax.random.split(key, 3)
        bound = 1.0 / math.sqrt(fan_in)
        w = jax.random.uniform(kw, (fan_in, fan_out), jnp.float32, -bound, bound)
        b = jax.random.uniform(kb, (1, fan_out), jnp.float32, -bound, bound)
        params.append((w, b))
    return params


def mlp_reference(x, params):
    h = x
    for (w, b) in params:
        h = jax.nn.sigmoid(h @ w + b)
    return h


if __name__ == "__main__":
    # Shapes consistent with the module's constructor.
    input_dim, first_hidden, second_hidden, output_dim = 32, 64, 32, 16
    batch = 256  # small demo batch; batch_tile=128 -> 2 grid steps (exercises megacore path)

    key = jax.random.PRNGKey(0)
    kx, kp = jax.random.split(key)
    x = jax.random.normal(kx, (batch, input_dim), jnp.float32)
    params = init_params(kp, input_dim, first_hidden, second_hidden, output_dim)

    ref = mlp_reference(x, params)

    # bf16-fed MXU path (default).
    out = jax.block_until_ready(mlp_forward(x, params, batch_tile=128))
    assert out.shape == (batch, output_dim)
    assert jnp.allclose(out, ref, atol=2e-2), "bf16 path mismatch vs reference"

    # Full-f32 path (tight check).
    out_f32 = jax.block_until_ready(mlp_forward(x, params, batch_tile=128, use_bf16=False))
    assert jnp.allclose(out_f32, ref, atol=1e-4, rtol=1e-4), "f32 path mismatch vs reference"

    # second_hidden_layer == 0 branch (2-layer network).
    params2 = init_params(kp, input_dim, first_hidden, 0, output_dim)
    out2 = jax.block_until_ready(mlp_forward(x, params2, batch_tile=128, use_bf16=False))
    ref2 = mlp_reference(x, params2)
    assert jnp.allclose(out2, ref2, atol=1e-4, rtol=1e-4), "2-layer variant mismatch"

    print("KERNEL_OK")
</pallas_src>

<mosaic_0001>
module attributes {stable_mosaic.version = 11 : i64} {
  func.func @_mlp_kernel(%arg0: i32, %arg1: memref<16x256xbf16, #tpu.memory_space<vmem>>, %arg2: memref<256x512xbf16, #tpu.memory_space<vmem>>, %arg3: memref<1x512xf32, #tpu.memory_space<vmem>>, %arg4: memref<512x256xbf16, #tpu.memory_space<vmem>>, %arg5: memref<1x256xf32, #tpu.memory_space<vmem>>, %arg6: memref<256x128xbf16, #tpu.memory_space<vmem>>, %arg7: memref<1x128xf32, #tpu.memory_space<vmem>>, %arg8: memref<16x128xf32, #tpu.memory_space<vmem>>) attributes {dimension_semantics = [#tpu.dimension_semantics<parallel>], iteration_bounds = array<i64: 2>, scalar_prefetch = 0 : i64, scratch_operands = 0 : i64, tpu.core_type = #tpu.core_type<tc>, window_params = [{transform_indices = @transform_0, window_bounds = array<i64: 16, 256>}, {pipeline_mode = #tpu.pipeline_mode<synchronous>, transform_indices = @transform_1, window_bounds = array<i64: 256, 512>}, {pipeline_mode = #tpu.pipeline_mode<synchronous>, transform_indices = @transform_2, window_bounds = array<i64: 1, 512>}, {pipeline_mode = #tpu.pipeline_mode<synchronous>, transform_indices = @transform_3, window_bounds = array<i64: 512, 256>}, {pipeline_mode = #tpu.pipeline_mode<synchronous>, transform_indices = @transform_4, window_bounds = array<i64: 1, 256>}, {pipeline_mode = #tpu.pipeline_mode<synchronous>, transform_indices = @transform_5, window_bounds = array<i64: 256, 128>}, {pipeline_mode = #tpu.pipeline_mode<synchronous>, transform_indices = @transform_6, window_bounds = array<i64: 1, 128>}, {transform_indices = @transform_7, window_bounds = array<i64: 16, 128>}]} {
    %c0 = arith.constant 0 : index
    %c0_0 = arith.constant 0 : index
    %0 = vector.load %arg1[%c0, %c0_0] : memref<16x256xbf16, #tpu.memory_space<vmem>>, vector<16x256xbf16>
    %c0_1 = arith.constant 0 : index
    %c0_2 = arith.constant 0 : index
    %1 = vector.load %arg2[%c0_1, %c0_2] : memref<256x512xbf16, #tpu.memory_space<vmem>>, vector<256x512xbf16>
    %c0_3 = arith.constant 0 : index
    %c0_4 = arith.constant 0 : index
    %2 = vector.load %arg3[%c0_3, %c0_4] : memref<1x512xf32, #tpu.memory_space<vmem>>, vector<1x512xf32>
    %cst = arith.constant dense<0.000000e+00> : vector<16x512xf32>
    %3 = tpu.matmul %0, %1, %cst {dimension_numbers = #tpu.dot_dimension_numbers<[1], [0], [0], [1], [0, 0, 1, 1], [], []>} : vector<16x256xbf16>, vector<256x512xbf16>, vector<16x512xf32> -> vector<16x512xf32>
    %4 = vector.broadcast %2 : vector<1x512xf32> to vector<16x512xf32>
    %5 = arith.addf %3, %4 : vector<16x512xf32>
    %6 = arith.negf %5 : vector<16x512xf32>
    %7 = math.exp %6 : vector<16x512xf32>
    %cst_5 = arith.constant 1.000000e+00 : f32
    %8 = vector.broadcast %cst_5 : f32 to vector<16x512xf32>
    %9 = arith.addf %8, %7 : vector<16x512xf32>
    %10 = arith.divf %8, %9 : vector<16x512xf32>
    %11 = arith.truncf %10 : vector<16x512xf32> to vector<16x512xbf16>
    %c0_6 = arith.constant 0 : index
    %c0_7 = arith.constant 0 : index
    %12 = vector.load %arg4[%c0_6, %c0_7] : memref<512x256xbf16, #tpu.memory_space<vmem>>, vector<512x256xbf16>
    %c0_8 = arith.constant 0 : index
    %c0_9 = arith.constant 0 : index
    %13 = vector.load %arg5[%c0_8, %c0_9] : memref<1x256xf32, #tpu.memory_space<vmem>>, vector<1x256xf32>
    %cst_10 = arith.constant dense<0.000000e+00> : vector<16x256xf32>
    %14 = tpu.matmul %11, %12, %cst_10 {dimension_numbers = #tpu.dot_dimension_numbers<[1], [0], [0], [1], [0, 0, 1, 1], [], []>} : vector<16x512xbf16>, vector<512x256xbf16>, vector<16x256xf32> -> vector<16x256xf32>
    %15 = vector.broadcast %13 : vector<1x256xf32> to vector<16x256xf32>
    %16 = arith.addf %14, %15 : vector<16x256xf32>
    %17 = arith.negf %16 : vector<16x256xf32>
    %18 = math.exp %17 : vector<16x256xf32>
    %cst_11 = arith.constant 1.000000e+00 : f32
    %19 = vector.broadcast %cst_11 : f32 to vector<16x256xf32>
    %20 = arith.addf %19, %18 : vector<16x256xf32>
    %21 = arith.divf %19, %20 : vector<16x256xf32>
    %22 = arith.truncf %21 : vector<16x256xf32> to vector<16x256xbf16>
    %c0_12 = arith.constant 0 : index
    %c0_13 = arith.constant 0 : index
    %23 = vector.load %arg6[%c0_12, %c0_13] : memref<256x128xbf16, #tpu.memory_space<vmem>>, vector<256x128xbf16>
    %c0_14 = arith.constant 0 : index
    %c0_15 = arith.constant 0 : index
    %24 = vector.load %arg7[%c0_14, %c0_15] : memref<1x128xf32, #tpu.memory_space<vmem>>, vector<1x128xf32>
    %cst_16 = arith.constant dense<0.000000e+00> : vector<16x128xf32>
    %25 = tpu.matmul %22, %23, %cst_16 {dimension_numbers = #tpu.dot_dimension_numbers<[1], [0], [0], [1], [0, 0, 1, 1], [], []>} : vector<16x256xbf16>, vector<256x128xbf16>, vector<16x128xf32> -> vector<16x128xf32>
    %26 = vector.broadcast %24 : vector<1x128xf32> to vector<16x128xf32>
    %27 = arith.addf %25, %26 : vector<16x128xf32>
    %28 = arith.negf %27 : vector<16x128xf32>
    %29 = math.exp %28 : vector<16x128xf32>
    %cst_17 = arith.constant 1.000000e+00 : f32
    %30 = vector.broadcast %cst_17 : f32 to vector<16x128xf32>
    %31 = arith.addf %30, %29 : vector<16x128xf32>
    %32 = arith.divf %30, %31 : vector<16x128xf32>
    %c0_18 = arith.constant 0 : index
    %c0_19 = arith.constant 0 : index
    %33 = vector.load %arg8[%c0_18, %c0_19] : memref<16x128xf32, #tpu.memory_space<vmem>>, vector<16x128xf32>
    tpu.vector_store %arg8[%c0_18, %c0_19], %32 {strides = array<i32>} : memref<16x128xf32, #tpu.memory_space<vmem>>, vector<16x128xf32>,
    return
  }
  func.func @transform_0(%arg0: i32) -> (i32, i32) {
    %c0_i32 = arith.constant 0 : i32
    %c0_i32_0 = arith.constant 0 : i32
    return %arg0, %c0_i32 : i32, i32
  }
  func.func @transform_1(%arg0: i32) -> (i32, i32) {
    %c0_i32 = arith.constant 0 : i32
    %c0_i32_0 = arith.constant 0 : i32
    %c0_i32_1 = arith.constant 0 : i32
    return %c0_i32, %c0_i32_0 : i32, i32
  }
  func.func @transform_2(%arg0: i32) -> (i32, i32) {
    %c0_i32 = arith.constant 0 : i32
    %c0_i32_0 = arith.constant 0 : i32
    %c0_i32_1 = arith.constant 0 : i32
    return %c0_i32, %c0_i32_0 : i32, i32
  }
  func.func @transform_3(%arg0: i32) -> (i32, i32) {
    %c0_i32 = arith.constant 0 : i32
    %c0_i32_0 = arith.constant 0 : i32
    %c0_i32_1 = arith.constant 0 : i32
    return %c0_i32, %c0_i32_0 : i32, i32
  }
  func.func @transform_4(%arg0: i32) -> (i32, i32) {
    %c0_i32 = arith.constant 0 : i32
    %c0_i32_0 = arith.constant 0 : i32
    %c0_i32_1 = arith.constant 0 : i32
    return %c0_i32, %c0_i32_0 : i32, i32
  }
  func.func @transform_5(%arg0: i32) -> (i32, i32) {
    %c0_i32 = arith.constant 0 : i32
    %c0_i32_0 = arith.constant 0 : i32
    %c0_i32_1 = arith.constant 0 : i32
    return %c0_i32, %c0_i32_0 : i32, i32
  }
  func.func @transform_6(%arg0: i32) -> (i32, i32) {
    %c0_i32 = arith.constant 0 : i32
    %c0_i32_0 = arith.constant 0 : i32
    %c0_i32_1 = arith.constant 0 : i32
    return %c0_i32, %c0_i32_0 : i32, i32
  }
  func.func @transform_7(%arg0: i32) -> (i32, i32) {
    %c0_i32 = arith.constant 0 : i32
    %c0_i32_0 = arith.constant 0 : i32
    return %arg0, %c0_i32 : i32, i32
  }
}

</mosaic_0001>

<llo_original>
// kernel: mlp_forward.1
$region0: #{mlp_forward.1}
  #allocation0 [shape = 'u32[]', space=smem, size = 0x4, offset = 0x4, fixed_abs, tag = 'smem constant byte address 0x4 - core index']
  #allocation1 [shape = 'u32[72,128]{1,0:T(1,128)}', space=vmem, size = 0x9000, scoped, tag = 'internal scratch']
  %s0 = inlined_call_operand.vmem [shape: bf16[32,256], index: 0, kind: input, shape index: {}]
  %s1 = inlined_call_operand.vmem [shape: bf16[256,512], index: 1, kind: input, shape index: {}]
  %s2 = inlined_call_operand.vmem [shape: f32[1,512], index: 2, kind: input, shape index: {}]
  %s3 = inlined_call_operand.vmem [shape: bf16[512,256], index: 3, kind: input, shape index: {}]
  %s4 = inlined_call_operand.vmem [shape: f32[1,256], index: 4, kind: input, shape index: {}]
  %s5 = inlined_call_operand.vmem [shape: bf16[256,128], index: 5, kind: input, shape index: {}]
  %s6 = inlined_call_operand.vmem [shape: f32[1,128], index: 6, kind: input, shape index: {}]
  %s7 = inlined_call_operand.vmem [shape: f32[32,128], index: 7, kind: output, shape index: {}]
  %s8 = sld [smem:[#allocation0]]
  $region61: #{mlp_forward.1} parent=0
    _
  %s10 = ssub.s32 1, %s8
  %s11 = scalar_select 0, %s10, %s8
  loop: start=0, step=1, limit=4
  $region2: #{mlp_forward.1} parent=0 // loop_pre_header
    _
  $region3: #{mlp_forward.1} parent=0 // loop_header
    %s13 = sphi 0, %s17
    %p14 = scmp.ge.s32.totalorder %s13, 4
    %s23 = sphi 0, %s25
    %s26 = sphi 0, %s23
    %s27 = sphi 0, %s26
    %s43 = sphi 0, %s27
    %s47 = sphi 0, %s47
    %s49 = sphi 0, %s47
    %s50 = sphi 0, %s49
    %s64 = sphi 0, %s50
    %s68 = sphi 0, %s68
    %s70 = sphi 0, %s68
    %s71 = sphi 0, %s70
    %s85 = sphi 0, %s71
    %s89 = sphi 0, %s89
    %s91 = sphi 0, %s89
    %s92 = sphi 0, %s91
    %s106 = sphi 0, %s92
    %s110 = sphi 0, %s110
    %s112 = sphi 0, %s110
    %s113 = sphi 0, %s112
    %s127 = sphi 0, %s113
    %s131 = sphi 0, %s131
    %s133 = sphi 0, %s131
    %s134 = sphi 0, %s133
    %s148 = sphi 0, %s134
    %s152 = sphi 0, %s152
    %s154 = sphi 0, %s152
    %s155 = sphi 0, %s154
    %s169 = sphi 0, %s155
    %s175 = sphi 0, %s177
    %s178 = sphi 0, %s175
    %s179 = sphi 0, %s178
    %s195 = sphi 0, %s179
  $region4: #{mlp_forward.1} parent=0 // loop_header_branch
    %16 = sbr.rel (%p14) target = $region8
  $region5: #{mlp_forward.1} parent=0 // loop_body
    %s18 = ssub.s32 %s13, 1
    %s19 = ssub.s32 %s13, 2
    %s20 = sadd.s32 %s13, 1
    %s21 = ssub.s32 %s13, %s20
    %p22 = scmp.eq.s32.totalorder %s21, 0
    %s24 = sadd.s32 %s23, 1
    %s25 = scalar_select %p22, %s23, %s24
    %p28 = pneg %p22
    %p29 = scmp.eq.s32.totalorder %s13, 1
    %p30 = por %p28, %p29
    %p31 = scmp.ne.s32.totalorder %s23, %s26
    %p32 = scmp.eq.s32.totalorder %s13, 0
    %p33 = por %p31, %p32
    %p34 = scmp.ne.s32.totalorder %s23, %s26
    %p35 = scmp.eq.s32.totalorder %s18, 1
    %p36 = por %p34, %p35
    %p37 = scmp.ne.s32.totalorder %s26, %s27
    %p38 = scmp.eq.s32.totalorder %s18, 0
    %p39 = por %p37, %p38
    %p40 = scmp.ne.s32.totalorder %s26, %s27
    %p41 = scmp.eq.s32.totalorder %s19, 1
    %p42 = por %p40, %p41
    %p44 = scmp.ne.s32.totalorder %s27, %s43
    %p45 = scmp.eq.s32.totalorder %s19, 0
    %p46 = por %p44, %p45
    %s48 = sadd.s32 %s47, 1
    %p51 = scmp.eq.s32.totalorder %s13, 1
    %p52 = scmp.ne.s32.totalorder %s47, %s49
    %p53 = scmp.eq.s32.totalorder %s13, 0
    %p54 = por %p52, %p53
    %p55 = scmp.ne.s32.totalorder %s47, %s49
    %p56 = scmp.eq.s32.totalorder %s18, 1
    %p57 = por %p55, %p56
    %p58 = scmp.ne.s32.totalorder %s49, %s50
    %p59 = scmp.eq.s32.totalorder %s18, 0
    %p60 = por %p58, %p59
    %p61 = scmp.ne.s32.totalorder %s49, %s50
    %p62 = scmp.eq.s32.totalorder %s19, 1
    %p63 = por %p61, %p62
    %p65 = scmp.ne.s32.totalorder %s50, %s64
    %p66 = scmp.eq.s32.totalorder %s19, 0
    %p67 = por %p65, %p66
    %s69 = sadd.s32 %s68, 1
    %p72 = scmp.eq.s32.totalorder %s13, 1
    %p73 = scmp.ne.s32.totalorder %s68, %s70
    %p74 = scmp.eq.s32.totalorder %s13, 0
    %p75 = por %p73, %p74
    %p76 = scmp.ne.s32.totalorder %s68, %s70
    %p77 = scmp.eq.s32.totalorder %s18, 1
    %p78 = por %p76, %p77
    %p79 = scmp.ne.s32.totalorder %s70, %s71
    %p80 = scmp.eq.s32.totalorder %s18, 0
    %p81 = por %p79, %p80
    %p82 = scmp.ne.s32.totalorder %s70, %s71
    %p83 = scmp.eq.s32.totalorder %s19, 1
    %p84 = por %p82, %p83
    %p86 = scmp.ne.s32.totalorder %s71, %s85
    %p87 = scmp.eq.s32.totalorder %s19, 0
    %p88 = por %p86, %p87
    %s90 = sadd.s32 %s89, 1
    %p93 = scmp.eq.s32.totalorder %s13, 1
    %p94 = scmp.ne.s32.totalorder %s89, %s91
    %p95 = scmp.eq.s32.totalorder %s13, 0
    %p96 = por %p94, %p95
    %p97 = scmp.ne.s32.totalorder %s89, %s91
    %p98 = scmp.eq.s32.totalorder %s18, 1
    %p99 = por %p97, %p98
    %p100 = scmp.ne.s32.totalorder %s91, %s92
    %p101 = scmp.eq.s32.totalorder %s18, 0
    %p102 = por %p100, %p101
    %p103 = scmp.ne.s32.totalorder %s91, %s92
    %p104 = scmp.eq.s32.totalorder %s19, 1
    %p105 = por %p103, %p104
    %p107 = scmp.ne.s32.totalorder %s92, %s106
    %p108 = scmp.eq.s32.totalorder %s19, 0
    %p109 = por %p107, %p108
    %s111 = sadd.s32 %s110, 1
    %p114 = scmp.eq.s32.totalorder %s13, 1
    %p115 = scmp.ne.s32.totalorder %s110, %s112
    %p116 = scmp.eq.s32.totalorder %s13, 0
    %p117 = por %p115, %p116
    %p118 = scmp.ne.s32.totalorder %s110, %s112
    %p119 = scmp.eq.s32.totalorder %s18, 1
    %p120 = por %p118, %p119
    %p121 = scmp.ne.s32.totalorder %s112, %s113
    %p122 = scmp.eq.s32.totalorder %s18, 0
    %p123 = por %p121, %p122
    %p124 = scmp.ne.s32.totalorder %s112, %s113
    %p125 = scmp.eq.s32.totalorder %s19, 1
    %p126 = por %p124, %p125
    %p128 = scmp.ne.s32.totalorder %s113, %s127
    %p129 = scmp.eq.s32.totalorder %s19, 0
    %p130 = por %p128, %p129
    %s132 = sadd.s32 %s131, 1
    %p135 = scmp.eq.s32.totalorder %s13, 1
    %p136 = scmp.ne.s32.totalorder %s131, %s133
    %p137 = scmp.eq.s32.totalorder %s13, 0
    %p138 = por %p136, %p137
    %p139 = scmp.ne.s32.totalorder %s131, %s133
    %p140 = scmp.eq.s32.totalorder %s18, 1
    %p141 = por %p139, %p140
    %p142 = scmp.ne.s32.totalorder %s133, %s134
    %p143 = scmp.eq.s32.totalorder %s18, 0
    %p144 = por %p142, %p143
    %p145 = scmp.ne.s32.totalorder %s133, %s134
    %p146 = scmp.eq.s32.totalorder %s19, 1
    %p147 = por %p145, %p146
    %p149 = scmp.ne.s32.totalorder %s134, %s148
    %p150 = scmp.eq.s32.totalorder %s19, 0
    %p151 = por %p149, %p150
    %s153 = sadd.s32 %s152, 1
    %p156 = scmp.eq.s32.totalorder %s13, 1
    %p157 = scmp.ne.s32.totalorder %s152, %s154
    %p158 = scmp.eq.s32.totalorder %s13, 0
    %p159 = por %p157, %p158
    %p160 = scmp.ne.s32.totalorder %s152, %s154
    %p161 = scmp.eq.s32.totalorder %s18, 1
    %p162 = por %p160, %p161
    %p163 = scmp.ne.s32.totalorder %s154, %s155
    %p164 = scmp.eq.s32.totalorder %s18, 0
    %p165 = por %p163, %p164
    %p166 = scmp.ne.s32.totalorder %s154, %s155
    %p167 = scmp.eq.s32.totalorder %s19, 1
    %p168 = por %p166, %p167
    %p170 = scmp.ne.s32.totalorder %s155, %s169
    %p171 = scmp.eq.s32.totalorder %s19, 0
    %p172 = por %p170, %p171
    %s173 = ssub.s32 %s13, %s20
    %p174 = scmp.eq.s32.totalorder %s173, 0
    %s176 = sadd.s32 %s175, 1
    %s177 = scalar_select %p174, %s175, %s176
    %p180 = pneg %p174
    %p181 = scmp.eq.s32.totalorder %s13, 1
    %p182 = por %p180, %p181
    %p183 = scmp.ne.s32.totalorder %s175, %s178
    %p184 = scmp.eq.s32.totalorder %s13, 0
    %p185 = por %p183, %p184
    %p186 = scmp.ne.s32.totalorder %s175, %s178
    %p187 = scmp.eq.s32.totalorder %s18, 1
    %p188 = por %p186, %p187
    %p189 = scmp.ne.s32.totalorder %s178, %s179
    %p190 = scmp.eq.s32.totalorder %s18, 0
    %p191 = por %p189, %p190
    %p192 = scmp.ne.s32.totalorder %s178, %s179
    %p193 = scmp.eq.s32.totalorder %s19, 1
    %p194 = por %p192, %p193
    %p196 = scmp.ne.s32.totalorder %s179, %s195
    %p197 = scmp.eq.s32.totalorder %s19, 0
    %p198 = por %p196, %p197
    %p199 = scmp.le.s32.totalorder 1, %s13
    %p200 = scmp.lt.s32.totalorder %s13, 3
    %p201 = pnand %p199, %p200
    %p202 = pneg %p201
    // Predicated region
    $region9: #{mlp_forward.1} parent=5 // pred_check
      _
    $region10: #{mlp_forward.1} parent=5 // pred_check_branch
      %204 = sbr.rel (%p201) target = $region12
    $region11: #{mlp_forward.1} parent=5 // pred_region
      %s205 = ssub.s32 %s13, 1
      // Predicated region
      $region13: #{mlp_forward.1} parent=11 // pred_check
        %p206 = pneg %p60
      $region14: #{mlp_forward.1} parent=11 // pred_check_branch
        %208 = sbr.rel (%p206) target = $region16
      $region15: #{mlp_forward.1} parent=11 // pred_region
        _
      $region16: #{mlp_forward.1} parent=11 // pred_fallthru
        _
      // Predicated region
      $region17: #{mlp_forward.1} parent=11 // pred_check
        %p209 = pneg %p81
      $region18: #{mlp_forward.1} parent=11 // pred_check_branch
        %211 = sbr.rel (%p209) target = $region20
      $region19: #{mlp_forward.1} parent=11 // pred_region
        _
      $region20: #{mlp_forward.1} parent=11 // pred_fallthru
        _
      // Predicated region
      $region21: #{mlp_forward.1} parent=11 // pred_check
        %p212 = pneg %p102
      $region22: #{mlp_forward.1} parent=11 // pred_check_branch
        %214 = sbr.rel (%p212) target = $region24
      $region23: #{mlp_forward.1} parent=11 // pred_region
        _
      $region24: #{mlp_forward.1} parent=11 // pred_fallthru
        _
      // Predicated region
      $region25: #{mlp_forward.1} parent=11 // pred_check
        %p215 = pneg %p123
      $region26: #{mlp_forward.1} parent=11 // pred_check_branch
        %217 = sbr.rel (%p215) target = $region28
      $region27: #{mlp_forward.1} parent=11 // pred_region
        _
      $region28: #{mlp_forward.1} parent=11 // pred_fallthru
        _
      // Predicated region
      $region29: #{mlp_forward.1} parent=11 // pred_check
        %p218 = pneg %p144
      $region30: #{mlp_forward.1} parent=11 // pred_check_branch
        %220 = sbr.rel (%p218) target = $region32
      $region31: #{mlp_forward.1} parent=11 // pred_region
        _
      $region32: #{mlp_forward.1} parent=11 // pred_fallthru
        _
      // Predicated region
      $region33: #{mlp_forward.1} parent=11 // pred_check
        %p221 = pneg %p165
      $region34: #{mlp_forward.1} parent=11 // pred_check_branch
        %223 = sbr.rel (%p221) target = $region36
      $region35: #{mlp_forward.1} parent=11 // pred_region
        _
      $region36: #{mlp_forward.1} parent=11 // pred_fallthru
        _
    $region12: #{mlp_forward.1} parent=5 // pred_fallthru
      _
    %p224 = scmp.lt.s32.totalorder %s13, 2
    // Predicated region
    $region37: #{mlp_forward.1} parent=5 // pred_check
      %p225 = pneg %p224
    $region38: #{mlp_forward.1} parent=5 // pred_check_branch
      %227 = sbr.rel (%p225) target = $region40
    $region39: #{mlp_forward.1} parent=5 // pred_region
      // Predicated region
      $region41: #{mlp_forward.1} parent=39 // pred_check
        %p228 = pneg %p33
      $region42: #{mlp_forward.1} parent=39 // pred_check_branch
        %230 = sbr.rel (%p228) target = $region44
      $region43: #{mlp_forward.1} parent=39 // pred_region
        %s231 = smul.u32 2, %s13
        %p232 = scmp.lt.s32.totalorder %s231, 3
        %s233 = scalar_select %p232, %s231, 3
        %s234 = smul.addr %s233, 2
        %s235 = smul.addr %s234, 4
        %s236 = scalar_lea.vmem %s0, %s235
        %s237 = smul.u32 2, %s13
      $region44: #{mlp_forward.1} parent=39 // pred_fallthru
        _
    $region40: #{mlp_forward.1} parent=5 // pred_fallthru
      _
    %p238 = scmp.le.s32.totalorder 1, %s13
    %p239 = scmp.lt.s32.totalorder %s13, 3
    %p240 = pnand %p238, %p239
    %p241 = pneg %p240
    // Predicated region
    $region45: #{mlp_forward.1} parent=5 // pred_check
      _
    $region46: #{mlp_forward.1} parent=5 // pred_check_branch
      %243 = sbr.rel (%p240) target = $region48
    $region47: #{mlp_forward.1} parent=5 // pred_region
      %s244 = ssub.s32 %s13, 1
      %s245 = smul.u32 2, %s18
      %p246 = scmp.lt.s32.totalorder %s245, 3
      %s247 = scalar_select %p246, %s245, 3
      %s248 = smul.addr %s247, 2
      %s249 = smul.addr %s248, 4
      %s250 = scalar_lea.vmem %s0, %s249
      %p251 = pneg %p39
      %p252 = pneg %p36
      %p253 = pneg %p60
      %p254 = pneg %p57
      %p255 = pneg %p81
      %p256 = pneg %p78
      %p257 = pneg %p102
      %p258 = pneg %p99
      %p259 = pneg %p123
      %p260 = pneg %p120
      %p261 = pneg %p144
      %p262 = pneg %p141
      %p263 = pneg %p165
      %p264 = pneg %p162
      %p265 = pneg %p191
      %p266 = pneg %p188
      %s267 = smul.u32 2, %s18
      %p268 = scmp.lt.s32.totalorder %s267, 3
      %s269 = scalar_select %p268, %s267, 3
      %s270 = smul.addr %s269, 8
      %s271 = scalar_lea.vmem %s7, %s270
      %s272 = smul.u32 2, %s18
      %p273 = scmp.lt.s32.totalorder %s272, 3
      %s274 = scalar_select %p273, %s272, 3
      %s275 = smul.addr %s274, 2
      %s276 = smul.addr %s275, 4
      %s277 = scalar_lea.vmem %s0, %s276
      %s278 = smul.u32 2, %s18
      %s279 = smul.u32 2, %s18
      %p280 = scmp.lt.s32.totalorder %s279, 3
      %s281 = scalar_select %p280, %s279, 3
      %s282 = smul.addr %s281, 8
      %s283 = scalar_lea.vmem %s7, %s282
      %s284 = smul.u32 2, %s18
      %v285 = vld [vmem:[%s277] sm:$0xff]
      %v286 = vld [vmem:[%s277 + $0x8] sm:$0xff]
      %v287 = vld [vmem:[%s1] sm:$0xff]
      %v288 = vld [vmem:[%s1 + $0x8] sm:$0xff]
      %v289 = vld [vmem:[%s1 + $0x10] sm:$0xff]
      %v290 = vld [vmem:[%s1 + $0x18] sm:$0xff]
      %v291 = vld [vmem:[%s1 + $0x20] sm:$0xff]
      %v292 = vld [vmem:[%s1 + $0x28] sm:$0xff]
      %v293 = vld [vmem:[%s1 + $0x30] sm:$0xff]
      %v294 = vld [vmem:[%s1 + $0x38] sm:$0xff]
      %v295 = vld [vmem:[%s1 + $0x40] sm:$0xff]
      %v296 = vld [vmem:[%s1 + $0x48] sm:$0xff]
      %v297 = vld [vmem:[%s1 + $0x50] sm:$0xff]
      %v298 = vld [vmem:[%s1 + $0x58] sm:$0xff]
      %v299 = vld [vmem:[%s1 + $0x60] sm:$0xff]
      %v300 = vld [vmem:[%s1 + $0x68] sm:$0xff]
      %v301 = vld [vmem:[%s1 + $0x70] sm:$0xff]
      %v302 = vld [vmem:[%s1 + $0x78] sm:$0xff]
      %v303 = vld [vmem:[%s1 + $0x80] sm:$0xff]
      %v304 = vld [vmem:[%s1 + $0x88] sm:$0xff]
      %v305 = vld [vmem:[%s1 + $0x90] sm:$0xff]
      %v306 = vld [vmem:[%s1 + $0x98] sm:$0xff]
      %v307 = vld [vmem:[%s1 + $0xa0] sm:$0xff]
      %v308 = vld [vmem:[%s1 + $0xa8] sm:$0xff]
      %v309 = vld [vmem:[%s1 + $0xb0] sm:$0xff]
      %v310 = vld [vmem:[%s1 + $0xb8] sm:$0xff]
      %v311 = vld [vmem:[%s1 + $0xc0] sm:$0xff]
      %v312 = vld [vmem:[%s1 + $0xc8] sm:$0xff]
      %v313 = vld [vmem:[%s1 + $0xd0] sm:$0xff]
      %v314 = vld [vmem:[%s1 + $0xd8] sm:$0xff]
      %v315 = vld [vmem:[%s1 + $0xe0] sm:$0xff]
      %v316 = vld [vmem:[%s1 + $0xe8] sm:$0xff]
      %v317 = vld [vmem:[%s1 + $0xf0] sm:$0xff]
      %v318 = vld [vmem:[%s1 + $0xf8] sm:$0xff]
      %v319 = vld [vmem:[%s1 + $0x100] sm:$0xff]
      %v320 = vld [vmem:[%s1 + $0x108] sm:$0xff]
      %v321 = vld [vmem:[%s1 + $0x110] sm:$0xff]
      %v322 = vld [vmem:[%s1 + $0x118] sm:$0xff]
      %v323 = vld [vmem:[%s1 + $0x120] sm:$0xff]
      %v324 = vld [vmem:[%s1 + $0x128] sm:$0xff]
      %v325 = vld [vmem:[%s1 + $0x130] sm:$0xff]
      %v326 = vld [vmem:[%s1 + $0x138] sm:$0xff]
      %v327 = vld [vmem:[%s1 + $0x140] sm:$0xff]
      %v328 = vld [vmem:[%s1 + $0x148] sm:$0xff]
      %v329 = vld [vmem:[%s1 + $0x150] sm:$0xff]
      %v330 = vld [vmem:[%s1 + $0x158] sm:$0xff]
      %v331 = vld [vmem:[%s1 + $0x160] sm:$0xff]
      %v332 = vld [vmem:[%s1 + $0x168] sm:$0xff]
      %v333 = vld [vmem:[%s1 + $0x170] sm:$0xff]
      %v334 = vld [vmem:[%s1 + $0x178] sm:$0xff]
      %v335 = vld [vmem:[%s1 + $0x180] sm:$0xff]
      %v336 = vld [vmem:[%s1 + $0x188] sm:$0xff]
      %v337 = vld [vmem:[%s1 + $0x190] sm:$0xff]
      %v338 = vld [vmem:[%s1 + $0x198] sm:$0xff]
      %v339 = vld [vmem:[%s1 + $0x1a0] sm:$0xff]
      %v340 = vld [vmem:[%s1 + $0x1a8] sm:$0xff]
      %v341 = vld [vmem:[%s1 + $0x1b0] sm:$0xff]
      %v342 = vld [vmem:[%s1 + $0x1b8] sm:$0xff]
      %v343 = vld [vmem:[%s1 + $0x1c0] sm:$0xff]
      %v344 = vld [vmem:[%s1 + $0x1c8] sm:$0xff]
      %v345 = vld [vmem:[%s1 + $0x1d0] sm:$0xff]
      %v346 = vld [vmem:[%s1 + $0x1d8] sm:$0xff]
      %v347 = vld [vmem:[%s1 + $0x1e0] sm:$0xff]
      %v348 = vld [vmem:[%s1 + $0x1e8] sm:$0xff]
      %v349 = vld [vmem:[%s1 + $0x1f0] sm:$0xff]
      %v350 = vld [vmem:[%s1 + $0x1f8] sm:$0xff]
      %v351 = vld [vmem:[%s2] sm:$0xf]
      %v353 = vperm.slane %v351, 0
      %v354 = vperm.slane %v351, 1
      %v355 = vperm.slane %v351, 2
      %v356 = vperm.slane %v351, 3
      %v363 = vunpack.c.l.b16 %v285
      %v364 = vunpack.c.h.b16 %v285
      %v365 = vunpack.c.l.b16 %v286
      %v366 = vunpack.c.h.b16 %v286
      %v367 = vpack.c.b16 %v365, %v363
      %v368 = vpack.c.b16 %v366, %v364
      %v435 = vunpack.c.l.b16 %v287
      %v436 = vunpack.c.h.b16 %v287
      %v437 = vunpack.c.l.b16 %v288
      %v438 = vunpack.c.h.b16 %v288
      %v439 = vunpack.c.l.b16 %v289
      %v440 = vunpack.c.h.b16 %v289
      %v441 = vunpack.c.l.b16 %v290
      %v442 = vunpack.c.h.b16 %v290
      %v443 = vunpack.c.l.b16 %v291
      %v444 = vunpack.c.h.b16 %v291
      %v445 = vunpack.c.l.b16 %v292
      %v446 = vunpack.c.h.b16 %v292
      %v447 = vunpack.c.l.b16 %v293
      %v448 = vunpack.c.h.b16 %v293
      %v449 = vunpack.c.l.b16 %v294
      %v450 = vunpack.c.h.b16 %v294
      %v451 = vunpack.c.l.b16 %v295
      %v452 = vunpack.c.h.b16 %v295
      %v453 = vunpack.c.l.b16 %v296
      %v454 = vunpack.c.h.b16 %v296
      %v455 = vunpack.c.l.b16 %v297
      %v456 = vunpack.c.h.b16 %v297
      %v457 = vunpack.c.l.b16 %v298
      %v458 = vunpack.c.h.b16 %v298
      %v459 = vunpack.c.l.b16 %v299
      %v460 = vunpack.c.h.b16 %v299
      %v461 = vunpack.c.l.b16 %v300
      %v462 = vunpack.c.h.b16 %v300
      %v463 = vunpack.c.l.b16 %v301
      %v464 = vunpack.c.h.b16 %v301
      %v465 = vunpack.c.l.b16 %v302
      %v466 = vunpack.c.h.b16 %v302
      %v467 = vunpack.c.l.b16 %v303
      %v468 = vunpack.c.h.b16 %v303
      %v469 = vunpack.c.l.b16 %v304
      %v470 = vunpack.c.h.b16 %v304
      %v471 = vunpack.c.l.b16 %v305
      %v472 = vunpack.c.h.b16 %v305
      %v473 = vunpack.c.l.b16 %v306
      %v474 = vunpack.c.h.b16 %v306
      %v475 = vunpack.c.l.b16 %v307
      %v476 = vunpack.c.h.b16 %v307
      %v477 = vunpack.c.l.b16 %v308
      %v478 = vunpack.c.h.b16 %v308
      %v479 = vunpack.c.l.b16 %v309
      %v480 = vunpack.c.h.b16 %v309
      %v481 = vunpack.c.l.b16 %v310
      %v482 = vunpack.c.h.b16 %v310
      %v483 = vunpack.c.l.b16 %v311
      %v484 = vunpack.c.h.b16 %v311
      %v485 = vunpack.c.l.b16 %v312
      %v486 = vunpack.c.h.b16 %v312
      %v487 = vunpack.c.l.b16 %v313
      %v488 = vunpack.c.h.b16 %v313
      %v489 = vunpack.c.l.b16 %v314
      %v490 = vunpack.c.h.b16 %v314
      %v491 = vunpack.c.l.b16 %v315
      %v492 = vunpack.c.h.b16 %v315
      %v493 = vunpack.c.l.b16 %v316
      %v494 = vunpack.c.h.b16 %v316
      %v495 = vunpack.c.l.b16 %v317
      %v496 = vunpack.c.h.b16 %v317
      %v497 = vunpack.c.l.b16 %v318
      %v498 = vunpack.c.h.b16 %v318
      %v499 = vunpack.c.l.b16 %v319
      %v500 = vunpack.c.h.b16 %v319
      %v501 = vunpack.c.l.b16 %v320
      %v502 = vunpack.c.h.b16 %v320
      %v503 = vunpack.c.l.b16 %v321
      %v504 = vunpack.c.h.b16 %v321
      %v505 = vunpack.c.l.b16 %v322
      %v506 = vunpack.c.h.b16 %v322
      %v507 = vunpack.c.l.b16 %v323
      %v508 = vunpack.c.h.b16 %v323
      %v509 = vunpack.c.l.b16 %v324
      %v510 = vunpack.c.h.b16 %v324
      %v511 = vunpack.c.l.b16 %v325
      %v512 = vunpack.c.h.b16 %v325
      %v513 = vunpack.c.l.b16 %v326
      %v514 = vunpack.c.h.b16 %v326
      %v515 = vunpack.c.l.b16 %v327
      %v516 = vunpack.c.h.b16 %v327
      %v517 = vunpack.c.l.b16 %v328
      %v518 = vunpack.c.h.b16 %v328
      %v519 = vunpack.c.l.b16 %v329
      %v520 = vunpack.c.h.b16 %v329
      %v521 = vunpack.c.l.b16 %v330
      %v522 = vunpack.c.h.b16 %v330
      %v523 = vunpack.c.l.b16 %v331
      %v524 = vunpack.c.h.b16 %v331
      %v525 = vunpack.c.l.b16 %v332
      %v526 = vunpack.c.h.b16 %v332
      %v527 = vunpack.c.l.b16 %v333
      %v528 = vunpack.c.h.b16 %v333
      %v529 = vunpack.c.l.b16 %v334
      %v530 = vunpack.c.h.b16 %v334
      %v531 = vunpack.c.l.b16 %v335
      %v532 = vunpack.c.h.b16 %v335
      %v533 = vunpack.c.l.b16 %v336
      %v534 = vunpack.c.h.b16 %v336
      %v535 = vunpack.c.l.b16 %v337
      %v536 = vunpack.c.h.b16 %v337
      %v537 = vunpack.c.l.b16 %v338
      %v538 = vunpack.c.h.b16 %v338
      %v539 = vunpack.c.l.b16 %v339
      %v540 = vunpack.c.h.b16 %v339
      %v541 = vunpack.c.l.b16 %v340
      %v542 = vunpack.c.h.b16 %v340
      %v543 = vunpack.c.l.b16 %v341
      %v544 = vunpack.c.h.b16 %v341
      %v545 = vunpack.c.l.b16 %v342
      %v546 = vunpack.c.h.b16 %v342
      %v547 = vunpack.c.l.b16 %v343
      %v548 = vunpack.c.h.b16 %v343
      %v549 = vunpack.c.l.b16 %v344
      %v550 = vunpack.c.h.b16 %v344
      %v551 = vunpack.c.l.b16 %v345
      %v552 = vunpack.c.h.b16 %v345
      %v553 = vunpack.c.l.b16 %v346
      %v554 = vunpack.c.h.b16 %v346
      %v555 = vunpack.c.l.b16 %v347
      %v556 = vunpack.c.h.b16 %v347
      %v557 = vunpack.c.l.b16 %v348
      %v558 = vunpack.c.h.b16 %v348
      %v559 = vunpack.c.l.b16 %v349
      %v560 = vunpack.c.h.b16 %v349
      %v561 = vunpack.c.l.b16 %v350
      %v562 = vunpack.c.h.b16 %v350
      %v563 = vpack.c.b16 %v439, %v435
      %v564 = vpack.c.b16 %v440, %v436
      %v565 = vpack.c.b16 %v441, %v437
      %v566 = vpack.c.b16 %v442, %v438
      %v567 = vpack.c.b16 %v447, %v443
      %v568 = vpack.c.b16 %v448, %v444
      %v569 = vpack.c.b16 %v449, %v445
      %v570 = vpack.c.b16 %v450, %v446
      %v571 = vpack.c.b16 %v455, %v451
      %v572 = vpack.c.b16 %v456, %v452
      %v573 = vpack.c.b16 %v457, %v453
      %v574 = vpack.c.b16 %v458, %v454
      %v575 = vpack.c.b16 %v463, %v459
      %v576 = vpack.c.b16 %v464, %v460
      %v577 = vpack.c.b16 %v465, %v461
      %v578 = vpack.c.b16 %v466, %v462
      %v579 = vpack.c.b16 %v471, %v467
      %v580 = vpack.c.b16 %v472, %v468
      %v581 = vpack.c.b16 %v473, %v469
      %v582 = vpack.c.b16 %v474, %v470
      %v583 = vpack.c.b16 %v479, %v475
      %v584 = vpack.c.b16 %v480, %v476
      %v585 = vpack.c.b16 %v481, %v477
      %v586 = vpack.c.b16 %v482, %v478
      %v587 = vpack.c.b16 %v487, %v483
      %v588 = vpack.c.b16 %v488, %v484
      %v589 = vpack.c.b16 %v489, %v485
      %v590 = vpack.c.b16 %v490, %v486
      %v591 = vpack.c.b16 %v495, %v491
      %v592 = vpack.c.b16 %v496, %v492
      %v593 = vpack.c.b16 %v497, %v493
      %v594 = vpack.c.b16 %v498, %v494
      %v595 = vpack.c.b16 %v503, %v499
      %v596 = vpack.c.b16 %v504, %v500
      %v597 = vpack.c.b16 %v505, %v501
      %v598 = vpack.c.b16 %v506, %v502
      %v599 = vpack.c.b16 %v511, %v507
      %v600 = vpack.c.b16 %v512, %v508
      %v601 = vpack.c.b16 %v513, %v509
      %v602 = vpack.c.b16 %v514, %v510
      %v603 = vpack.c.b16 %v519, %v515
      %v604 = vpack.c.b16 %v520, %v516
      %v605 = vpack.c.b16 %v521, %v517
      %v606 = vpack.c.b16 %v522, %v518
      %v607 = vpack.c.b16 %v527, %v523
      %v608 = vpack.c.b16 %v528, %v524
      %v609 = vpack.c.b16 %v529, %v525
      %v610 = vpack.c.b16 %v530, %v526
      %v611 = vpack.c.b16 %v535, %v531
      %v612 = vpack.c.b16 %v536, %v532
      %v613 = vpack.c.b16 %v537, %v533
      %v614 = vpack.c.b16 %v538, %v534
      %v615 = vpack.c.b16 %v543, %v539
      %v616 = vpack.c.b16 %v544, %v540
      %v617 = vpack.c.b16 %v545, %v541
      %v618 = vpack.c.b16 %v546, %v542
      %v619 = vpack.c.b16 %v551, %v547
      %v620 = vpack.c.b16 %v552, %v548
      %v621 = vpack.c.b16 %v553, %v549
      %v622 = vpack.c.b16 %v554, %v550
      %v623 = vpack.c.b16 %v559, %v555
      %v624 = vpack.c.b16 %v560, %v556
      %v625 = vpack.c.b16 %v561, %v557
      %v626 = vpack.c.b16 %v562, %v558
      %691 = vmatpush.bf16.msra.mxu0 %v591
      %692 = vmatpush.bf16.msra.mxu0 %v587
      %693 = vmatpush.bf16.msra.mxu0 %v583
      %694 = vmatpush.bf16.msra.mxu0 %v579
      %695 = vmatpush.bf16.msra.mxu0 %v575
      %696 = vmatpush.bf16.msra.mxu0 %v571
      %697 = vmatpush.bf16.msra.mxu0 %v567
      %698 = vmatpush.bf16.msra.mxu0 %v563
      %699 = vmatmul.bf16.gmra.mxu0 %v367
      %v700 = vpop.f32.mrf.mxu0
      %v701 = vadd.f32 %v353, %v700
      %v702 = vpop.f32.mrf.mxu0
      %v703 = vadd.f32 %v353, %v702
      %704 = vdwg.mxu0
      %705 = vmatpush.bf16.msra.mxu0 %v623
      %706 = vmatpush.bf16.msra.mxu0 %v619
      %707 = vmatpush.bf16.msra.mxu0 %v615
      %708 = vmatpush.bf16.msra.mxu0 %v611
      %709 = vmatpush.bf16.msra.mxu0 %v607
      %710 = vmatpush.bf16.msra.mxu0 %v603
      %711 = vmatpush.bf16.msra.mxu0 %v599
      %712 = vmatpush.bf16.msra.mxu0 %v595
      %713 = vmatmul.bf16.gmra.mxu0 %v368
      %v714 = vpop.f32.mrf.mxu0
      %v715 = vadd.f32 %v701, %v714
      %v716 = vpop.f32.mrf.mxu0
      %v717 = vadd.f32 %v703, %v716
      %718 = vdwg.mxu0
      %719 = vmatpush.bf16.msra.mxu0 %v592
      %720 = vmatpush.bf16.msra.mxu0 %v588
      %721 = vmatpush.bf16.msra.mxu0 %v584
      %722 = vmatpush.bf16.msra.mxu0 %v580
      %723 = vmatpush.bf16.msra.mxu0 %v576
      %724 = vmatpush.bf16.msra.mxu0 %v572
      %725 = vmatpush.bf16.msra.mxu0 %v568
      %726 = vmatpush.bf16.msra.mxu0 %v564
      %727 = vmatmul.bf16.gmra.mxu0 %v367
      %v728 = vpop.f32.mrf.mxu0
      %v729 = vadd.f32 %v354, %v728
      %v730 = vpop.f32.mrf.mxu0
      %v731 = vadd.f32 %v354, %v730
      %732 = vdwg.mxu0
      %733 = vmatpush.bf16.msra.mxu0 %v624
      %734 = vmatpush.bf16.msra.mxu0 %v620
      %735 = vmatpush.bf16.msra.mxu0 %v616
      %736 = vmatpush.bf16.msra.mxu0 %v612
      %737 = vmatpush.bf16.msra.mxu0 %v608
      %738 = vmatpush.bf16.msra.mxu0 %v604
      %739 = vmatpush.bf16.msra.mxu0 %v600
      %740 = vmatpush.bf16.msra.mxu0 %v596
      %741 = vmatmul.bf16.gmra.mxu0 %v368
      %v742 = vpop.f32.mrf.mxu0
      %v743 = vadd.f32 %v729, %v742
      %v744 = vpop.f32.mrf.mxu0
      %v745 = vadd.f32 %v731, %v744
      %746 = vdwg.mxu0
      %747 = vmatpush.bf16.msra.mxu0 %v593
      %748 = vmatpush.bf16.msra.mxu0 %v589
      %749 = vmatpush.bf16.msra.mxu0 %v585
      %750 = vmatpush.bf16.msra.mxu0 %v581
      %751 = vmatpush.bf16.msra.mxu0 %v577
      %752 = vmatpush.bf16.msra.mxu0 %v573
      %753 = vmatpush.bf16.msra.mxu0 %v569
      %754 = vmatpush.bf16.msra.mxu0 %v565
      %755 = vmatmul.bf16.gmra.mxu0 %v367
      %v756 = vpop.f32.mrf.mxu0
      %v757 = vadd.f32 %v355, %v756
      %v758 = vpop.f32.mrf.mxu0
      %v759 = vadd.f32 %v355, %v758
      %760 = vdwg.mxu0
      %761 = vmatpush.bf16.msra.mxu0 %v625
      %762 = vmatpush.bf16.msra.mxu0 %v621
      %763 = vmatpush.bf16.msra.mxu0 %v617
      %764 = vmatpush.bf16.msra.mxu0 %v613
      %765 = vmatpush.bf16.msra.mxu0 %v609
      %766 = vmatpush.bf16.msra.mxu0 %v605
      %767 = vmatpush.bf16.msra.mxu0 %v601
      %768 = vmatpush.bf16.msra.mxu0 %v597
      %769 = vmatmul.bf16.gmra.mxu0 %v368
      %v770 = vpop.f32.mrf.mxu0
      %v771 = vadd.f32 %v757, %v770
      %v772 = vpop.f32.mrf.mxu0
      %v773 = vadd.f32 %v759, %v772
      %774 = vdwg.mxu0
      %775 = vmatpush.bf16.msra.mxu0 %v594
      %776 = vmatpush.bf16.msra.mxu0 %v590
      %777 = vmatpush.bf16.msra.mxu0 %v586
      %778 = vmatpush.bf16.msra.mxu0 %v582
      %779 = vmatpush.bf16.msra.mxu0 %v578
      %780 = vmatpush.bf16.msra.mxu0 %v574
      %781 = vmatpush.bf16.msra.mxu0 %v570
      %782 = vmatpush.bf16.msra.mxu0 %v566
      %783 = vmatmul.bf16.gmra.mxu0 %v367
      %v784 = vpop.f32.mrf.mxu0
      %v785 = vadd.f32 %v356, %v784
      %v786 = vpop.f32.mrf.mxu0
      %v787 = vadd.f32 %v356, %v786
      %788 = vdwg.mxu0
      %789 = vmatpush.bf16.msra.mxu0 %v626
      %790 = vmatpush.bf16.msra.mxu0 %v622
      %791 = vmatpush.bf16.msra.mxu0 %v618
      %792 = vmatpush.bf16.msra.mxu0 %v614
      %793 = vmatpush.bf16.msra.mxu0 %v610
      %794 = vmatpush.bf16.msra.mxu0 %v606
      %795 = vmatpush.bf16.msra.mxu0 %v602
      %796 = vmatpush.bf16.msra.mxu0 %v598
      %797 = vmatmul.bf16.gmra.mxu0 %v368
      %v798 = vpop.f32.mrf.mxu0
      %v799 = vadd.f32 %v785, %v798
      %v800 = vpop.f32.mrf.mxu0
      %v801 = vadd.f32 %v787, %v800
      %802 = vdwg.mxu0
      %v803 = vxor.u32 %v715, 2147483648
      %v804 = vxor.u32 %v743, 2147483648
      %v805 = vxor.u32 %v771, 2147483648
      %v806 = vxor.u32 %v799, 2147483648
      %v807 = vxor.u32 %v717, 2147483648
      %v808 = vxor.u32 %v745, 2147483648
      %v809 = vxor.u32 %v773, 2147483648
      %v810 = vxor.u32 %v801, 2147483648
      %v811 = vmul.f32 %v803, 1.442695
      %v812 = vpow.pop %v811
      %v813 = vmul.f32 %v804, 1.442695
      %v814 = vpow.pop %v813
      %v815 = vmul.f32 %v805, 1.442695
      %v816 = vpow.pop %v815
      %v817 = vmul.f32 %v806, 1.442695
      %v818 = vpow.pop %v817
      %v819 = vmul.f32 %v807, 1.442695
      %v820 = vpow.pop %v819
      %v821 = vmul.f32 %v808, 1.442695
      %v822 = vpow.pop %v821
      %v823 = vmul.f32 %v809, 1.442695
      %v824 = vpow.pop %v823
      %v825 = vmul.f32 %v810, 1.442695
      %v826 = vpow.pop %v825
      %v827 = vadd.f32 %v812, 1.0
      %v828 = vadd.f32 %v814, 1.0
      %v829 = vadd.f32 %v816, 1.0
      %v830 = vadd.f32 %v818, 1.0
      %v831 = vadd.f32 %v820, 1.0
      %v832 = vadd.f32 %v822, 1.0
      %v833 = vadd.f32 %v824, 1.0
      %v834 = vadd.f32 %v826, 1.0
      %v835 = vrcp.pop %v827
      %v836 = vmul.f32 %v827, %v835
      %v837 = vsub.f32 1.0, %v836
      %v838 = vmul.f32 %v835, %v837
      %v839 = vadd.f32 %v835, %v838
      %vm840 = vweird.f32 %v827
      %vm841 = vweird.f32 %v835
      %vm842 = vmor %vm840, %vm841
      %v843 = vsel %vm842, %v835, %v839
      %v844 = vand.u32 2147483647, %v827
      %vm845 = vcmp.eq.f32.partialorder %v844, 8.507059e+37
      %v846 = vand.u32 %v827, 2147483648
      %v847 = vor.u32 1.1754944e-38, %v846
      %v848 = vsel %vm845, %v847, %v843
      %v849 = vmul.f32 1.0, %v848
      %v850 = vrcp.pop %v828
      %v851 = vmul.f32 %v828, %v850
      %v852 = vsub.f32 1.0, %v851
      %v853 = vmul.f32 %v850, %v852
      %v854 = vadd.f32 %v850, %v853
      %vm855 = vweird.f32 %v828
      %vm856 = vweird.f32 %v850
      %vm857 = vmor %vm855, %vm856
      %v858 = vsel %vm857, %v850, %v854
      %v859 = vand.u32 2147483647, %v828
      %vm860 = vcmp.eq.f32.partialorder %v859, 8.507059e+37
      %v861 = vand.u32 %v828, 2147483648
      %v862 = vor.u32 1.1754944e-38, %v861
      %v863 = vsel %vm860, %v862, %v858
      %v864 = vmul.f32 1.0, %v863
      %v865 = vrcp.pop %v829
      %v866 = vmul.f32 %v829, %v865
      %v867 = vsub.f32 1.0, %v866
      %v868 = vmul.f32 %v865, %v867
      %v869 = vadd.f32 %v865, %v868
      %vm870 = vweird.f32 %v829
      %vm871 = vweird.f32 %v865
      %vm872 = vmor %vm870, %vm871
      %v873 = vsel %vm872, %v865, %v869
      %v874 = vand.u32 2147483647, %v829
      %vm875 = vcmp.eq.f32.partialorder %v874, 8.507059e+37
      %v876 = vand.u32 %v829, 2147483648
      %v877 = vor.u32 1.1754944e-38, %v876
      %v878 = vsel %vm875, %v877, %v873
      %v879 = vmul.f32 1.0, %v878
      %v880 = vrcp.pop %v830
      %v881 = vmul.f32 %v830, %v880
      %v882 = vsub.f32 1.0, %v881
      %v883 = vmul.f32 %v880, %v882
      %v884 = vadd.f32 %v880, %v883
      %vm885 = vweird.f32 %v830
      %vm886 = vweird.f32 %v880
      %vm887 = vmor %vm885, %vm886
      %v888 = vsel %vm887, %v880, %v884
      %v889 = vand.u32 2147483647, %v830
      %vm890 = vcmp.eq.f32.partialorder %v889, 8.507059e+37
      %v891 = vand.u32 %v830, 2147483648
      %v892 = vor.u32 1.1754944e-38, %v891
      %v893 = vsel %vm890, %v892, %v888
      %v894 = vmul.f32 1.0, %v893
      %v895 = vrcp.pop %v831
      %v896 = vmul.f32 %v831, %v895
      %v897 = vsub.f32 1.0, %v896
      %v898 = vmul.f32 %v895, %v897
      %v899 = vadd.f32 %v895, %v898
      %vm900 = vweird.f32 %v831
      %vm901 = vweird.f32 %v895
      %vm902 = vmor %vm900, %vm901
      %v903 = vsel %vm902, %v895, %v899
      %v904 = vand.u32 2147483647, %v831
      %vm905 = vcmp.eq.f32.partialorder %v904, 8.507059e+37
      %v906 = vand.u32 %v831, 2147483648
      %v907 = vor.u32 1.1754944e-38, %v906
      %v908 = vsel %vm905, %v907, %v903
      %v909 = vmul.f32 1.0, %v908
      %v910 = vrcp.pop %v832
      %v911 = vmul.f32 %v832, %v910
      %v912 = vsub.f32 1.0, %v911
      %v913 = vmul.f32 %v910, %v912
      %v914 = vadd.f32 %v910, %v913
      %vm915 = vweird.f32 %v832
      %vm916 = vweird.f32 %v910
      %vm917 = vmor %vm915, %vm916
      %v918 = vsel %vm917, %v910, %v914
      %v919 = vand.u32 2147483647, %v832
      %vm920 = vcmp.eq.f32.partialorder %v919, 8.507059e+37
      %v921 = vand.u32 %v832, 2147483648
      %v922 = vor.u32 1.1754944e-38, %v921
      %v923 = vsel %vm920, %v922, %v918
      %v924 = vmul.f32 1.0, %v923
      %v925 = vrcp.pop %v833
      %v926 = vmul.f32 %v833, %v925
      %v927 = vsub.f32 1.0, %v926
      %v928 = vmul.f32 %v925, %v927
      %v929 = vadd.f32 %v925, %v928
      %vm930 = vweird.f32 %v833
      %vm931 = vweird.f32 %v925
      %vm932 = vmor %vm930, %vm931
      %v933 = vsel %vm932, %v925, %v929
      %v934 = vand.u32 2147483647, %v833
      %vm935 = vcmp.eq.f32.partialorder %v934, 8.507059e+37
      %v936 = vand.u32 %v833, 2147483648
      %v937 = vor.u32 1.1754944e-38, %v936
      %v938 = vsel %vm935, %v937, %v933
      %v939 = vmul.f32 1.0, %v938
      %v940 = vrcp.pop %v834
      %v941 = vmul.f32 %v834, %v940
      %v942 = vsub.f32 1.0, %v941
      %v943 = vmul.f32 %v940, %v942
      %v944 = vadd.f32 %v940, %v943
      %vm945 = vweird.f32 %v834
      %vm946 = vweird.f32 %v940
      %vm947 = vmor %vm945, %vm946
      %v948 = vsel %vm947, %v940, %v944
      %v949 = vand.u32 2147483647, %v834
      %vm950 = vcmp.eq.f32.partialorder %v949, 8.507059e+37
      %v951 = vand.u32 %v834, 2147483648
      %v952 = vor.u32 1.1754944e-38, %v951
      %v953 = vsel %vm950, %v952, %v948
      %v954 = vmul.f32 1.0, %v953
      %v955 = vpack.c.bf16 %v909, %v849
      %v956 = vpack.c.bf16 %v924, %v864
      %v957 = vpack.c.bf16 %v939, %v879
      %v958 = vpack.c.bf16 %v954, %v894
      %v959 = vld [vmem:[%s3] sm:$0xff]
      %v960 = vld [vmem:[%s3 + $0x8] sm:$0xff]
      %v961 = vld [vmem:[%s3 + $0x10] sm:$0xff]
      %v962 = vld [vmem:[%s3 + $0x18] sm:$0xff]
      %v963 = vld [vmem:[%s3 + $0x20] sm:$0xff]
      %v964 = vld [vmem:[%s3 + $0x28] sm:$0xff]
      %v965 = vld [vmem:[%s3 + $0x30] sm:$0xff]
      %v966 = vld [vmem:[%s3 + $0x38] sm:$0xff]
      %v967 = vld [vmem:[%s3 + $0x40] sm:$0xff]
      %v968 = vld [vmem:[%s3 + $0x48] sm:$0xff]
      %v969 = vld [vmem:[%s3 + $0x50] sm:$0xff]
      %v970 = vld [vmem:[%s3 + $0x58] sm:$0xff]
      %v971 = vld [vmem:[%s3 + $0x60] sm:$0xff]
      %v972 = vld [vmem:[%s3 + $0x68] sm:$0xff]
      %v973 = vld [vmem:[%s3 + $0x70] sm:$0xff]
      %v974 = vld [vmem:[%s3 + $0x78] sm:$0xff]
      %v975 = vld [vmem:[%s3 + $0x80] sm:$0xff]
      %v976 = vld [vmem:[%s3 + $0x88] sm:$0xff]
      %v977 = vld [vmem:[%s3 + $0x90] sm:$0xff]
      %v978 = vld [vmem:[%s3 + $0x98] sm:$0xff]
      %v979 = vld [vmem:[%s3 + $0xa0] sm:$0xff]
      %v980 = vld [vmem:[%s3 + $0xa8] sm:$0xff]
      %v981 = vld [vmem:[%s3 + $0xb0] sm:$0xff]
      %v982 = vld [vmem:[%s3 + $0xb8] sm:$0xff]
      %v983 = vld [vmem:[%s3 + $0xc0] sm:$0xff]
      %v984 = vld [vmem:[%s3 + $0xc8] sm:$0xff]
      %v985 = vld [vmem:[%s3 + $0xd0] sm:$0xff]
      %v986 = vld [vmem:[%s3 + $0xd8] sm:$0xff]
      %v987 = vld [vmem:[%s3 + $0xe0] sm:$0xff]
      %v988 = vld [vmem:[%s3 + $0xe8] sm:$0xff]
      %v989 = vld [vmem:[%s3 + $0xf0] sm:$0xff]
      %v990 = vld [vmem:[%s3 + $0xf8] sm:$0xff]
      %v991 = vld [vmem:[%s3 + $0x100] sm:$0xff]
      %v992 = vld [vmem:[%s3 + $0x108] sm:$0xff]
      %v993 = vld [vmem:[%s3 + $0x110] sm:$0xff]
      %v994 = vld [vmem:[%s3 + $0x118] sm:$0xff]
      %v995 = vld [vmem:[%s3 + $0x120] sm:$0xff]
      %v996 = vld [vmem:[%s3 + $0x128] sm:$0xff]
      %v997 = vld [vmem:[%s3 + $0x130] sm:$0xff]
      %v998 = vld [vmem:[%s3 + $0x138] sm:$0xff]
      %v999 = vld [vmem:[%s3 + $0x140] sm:$0xff]
      %v1000 = vld [vmem:[%s3 + $0x148] sm:$0xff]
      %v1001 = vld [vmem:[%s3 + $0x150] sm:$0xff]
      %v1002 = vld [vmem:[%s3 + $0x158] sm:$0xff]
      %v1003 = vld [vmem:[%s3 + $0x160] sm:$0xff]
      %v1004 = vld [vmem:[%s3 + $0x168] sm:$0xff]
      %v1005 = vld [vmem:[%s3 + $0x170] sm:$0xff]
      %v1006 = vld [vmem:[%s3 + $0x178] sm:$0xff]
      %v1007 = vld [vmem:[%s3 + $0x180] sm:$0xff]
      %v1008 = vld [vmem:[%s3 + $0x188] sm:$0xff]
      %v1009 = vld [vmem:[%s3 + $0x190] sm:$0xff]
      %v1010 = vld [vmem:[%s3 + $0x198] sm:$0xff]
      %v1011 = vld [vmem:[%s3 + $0x1a0] sm:$0xff]
      %v1012 = vld [vmem:[%s3 + $0x1a8] sm:$0xff]
      %v1013 = vld [vmem:[%s3 + $0x1b0] sm:$0xff]
      %v1014 = vld [vmem:[%s3 + $0x1b8] sm:$0xff]
      %v1015 = vld [vmem:[%s3 + $0x1c0] sm:$0xff]
      %v1016 = vld [vmem:[%s3 + $0x1c8] sm:$0xff]
      %v1017 = vld [vmem:[%s3 + $0x1d0] sm:$0xff]
      %v1018 = vld [vmem:[%s3 + $0x1d8] sm:$0xff]
      %v1019 = vld [vmem:[%s3 + $0x1e0] sm:$0xff]
      %v1020 = vld [vmem:[%s3 + $0x1e8] sm:$0xff]
      %v1021 = vld [vmem:[%s3 + $0x1f0] sm:$0xff]
      %v1022 = vld [vmem:[%s3 + $0x1f8] sm:$0xff]
      %v1023 = vld [vmem:[%s4] sm:$0x3]
      %v1025 = vperm.slane %v1023, 0
      %v1026 = vperm.slane %v1023, 1
      %v1093 = vunpack.c.l.b16 %v959
      %v1094 = vunpack.c.h.b16 %v959
      %v1095 = vunpack.c.l.b16 %v960
      %v1096 = vunpack.c.h.b16 %v960
      %v1097 = vunpack.c.l.b16 %v961
      %v1098 = vunpack.c.h.b16 %v961
      %v1099 = vunpack.c.l.b16 %v962
      %v1100 = vunpack.c.h.b16 %v962
      %v1101 = vunpack.c.l.b16 %v963
      %v1102 = vunpack.c.h.b16 %v963
      %v1103 = vunpack.c.l.b16 %v964
      %v1104 = vunpack.c.h.b16 %v964
      %v1105 = vunpack.c.l.b16 %v965
      %v1106 = vunpack.c.h.b16 %v965
      %v1107 = vunpack.c.l.b16 %v966
      %v1108 = vunpack.c.h.b16 %v966
      %v1109 = vunpack.c.l.b16 %v967
      %v1110 = vunpack.c.h.b16 %v967
      %v1111 = vunpack.c.l.b16 %v968
      %v1112 = vunpack.c.h.b16 %v968
      %v1113 = vunpack.c.l.b16 %v969
      %v1114 = vunpack.c.h.b16 %v969
      %v1115 = vunpack.c.l.b16 %v970
      %v1116 = vunpack.c.h.b16 %v970
      %v1117 = vunpack.c.l.b16 %v971
      %v1118 = vunpack.c.h.b16 %v971
      %v1119 = vunpack.c.l.b16 %v972
      %v1120 = vunpack.c.h.b16 %v972
      %v1121 = vunpack.c.l.b16 %v973
      %v1122 = vunpack.c.h.b16 %v973
      %v1123 = vunpack.c.l.b16 %v974
      %v1124 = vunpack.c.h.b16 %v974
      %v1125 = vunpack.c.l.b16 %v975
      %v1126 = vunpack.c.h.b16 %v975
      %v1127 = vunpack.c.l.b16 %v976
      %v1128 = vunpack.c.h.b16 %v976
      %v1129 = vunpack.c.l.b16 %v977
      %v1130 = vunpack.c.h.b16 %v977
      %v1131 = vunpack.c.l.b16 %v978
      %v1132 = vunpack.c.h.b16 %v978
      %v1133 = vunpack.c.l.b16 %v979
      %v1134 = vunpack.c.h.b16 %v979
      %v1135 = vunpack.c.l.b16 %v980
      %v1136 = vunpack.c.h.b16 %v980
      %v1137 = vunpack.c.l.b16 %v981
      %v1138 = vunpack.c.h.b16 %v981
      %v1139 = vunpack.c.l.b16 %v982
      %v1140 = vunpack.c.h.b16 %v982
      %v1141 = vunpack.c.l.b16 %v983
      %v1142 = vunpack.c.h.b16 %v983
      %v1143 = vunpack.c.l.b16 %v984
      %v1144 = vunpack.c.h.b16 %v984
      %v1145 = vunpack.c.l.b16 %v985
      %v1146 = vunpack.c.h.b16 %v985
      %v1147 = vunpack.c.l.b16 %v986
      %v1148 = vunpack.c.h.b16 %v986
      %v1149 = vunpack.c.l.b16 %v987
      %v1150 = vunpack.c.h.b16 %v987
      %v1151 = vunpack.c.l.b16 %v988
      %v1152 = vunpack.c.h.b16 %v988
      %v1153 = vunpack.c.l.b16 %v989
      %v1154 = vunpack.c.h.b16 %v989
      %v1155 = vunpack.c.l.b16 %v990
      %v1156 = vunpack.c.h.b16 %v990
      %v1157 = vunpack.c.l.b16 %v991
      %v1158 = vunpack.c.h.b16 %v991
      %v1159 = vunpack.c.l.b16 %v992
      %v1160 = vunpack.c.h.b16 %v992
      %v1161 = vunpack.c.l.b16 %v993
      %v1162 = vunpack.c.h.b16 %v993
      %v1163 = vunpack.c.l.b16 %v994
      %v1164 = vunpack.c.h.b16 %v994
      %v1165 = vunpack.c.l.b16 %v995
      %v1166 = vunpack.c.h.b16 %v995
      %v1167 = vunpack.c.l.b16 %v996
      %v1168 = vunpack.c.h.b16 %v996
      %v1169 = vunpack.c.l.b16 %v997
      %v1170 = vunpack.c.h.b16 %v997
      %v1171 = vunpack.c.l.b16 %v998
      %v1172 = vunpack.c.h.b16 %v998
      %v1173 = vunpack.c.l.b16 %v999
      %v1174 = vunpack.c.h.b16 %v999
      %v1175 = vunpack.c.l.b16 %v1000
      %v1176 = vunpack.c.h.b16 %v1000
      %v1177 = vunpack.c.l.b16 %v1001
      %v1178 = vunpack.c.h.b16 %v1001
      %v1179 = vunpack.c.l.b16 %v1002
      %v1180 = vunpack.c.h.b16 %v1002
      %v1181 = vunpack.c.l.b16 %v1003
      %v1182 = vunpack.c.h.b16 %v1003
      %v1183 = vunpack.c.l.b16 %v1004
      %v1184 = vunpack.c.h.b16 %v1004
      %v1185 = vunpack.c.l.b16 %v1005
      %v1186 = vunpack.c.h.b16 %v1005
      %v1187 = vunpack.c.l.b16 %v1006
      %v1188 = vunpack.c.h.b16 %v1006
      %v1189 = vunpack.c.l.b16 %v1007
      %v1190 = vunpack.c.h.b16 %v1007
      %v1191 = vunpack.c.l.b16 %v1008
      %v1192 = vunpack.c.h.b16 %v1008
      %v1193 = vunpack.c.l.b16 %v1009
      %v1194 = vunpack.c.h.b16 %v1009
      %v1195 = vunpack.c.l.b16 %v1010
      %v1196 = vunpack.c.h.b16 %v1010
      %v1197 = vunpack.c.l.b16 %v1011
      %v1198 = vunpack.c.h.b16 %v1011
      %v1199 = vunpack.c.l.b16 %v1012
      %v1200 = vunpack.c.h.b16 %v1012
      %v1201 = vunpack.c.l.b16 %v1013
      %v1202 = vunpack.c.h.b16 %v1013
      %v1203 = vunpack.c.l.b16 %v1014
      %v1204 = vunpack.c.h.b16 %v1014
      %v1205 = vunpack.c.l.b16 %v1015
      %v1206 = vunpack.c.h.b16 %v1015
      %v1207 = vunpack.c.l.b16 %v1016
      %v1208 = vunpack.c.h.b16 %v1016
      %v1209 = vunpack.c.l.b16 %v1017
      %v1210 = vunpack.c.h.b16 %v1017
      %v1211 = vunpack.c.l.b16 %v1018
      %v1212 = vunpack.c.h.b16 %v1018
      %v1213 = vunpack.c.l.b16 %v1019
      %v1214 = vunpack.c.h.b16 %v1019
      %v1215 = vunpack.c.l.b16 %v1020
      %v1216 = vunpack.c.h.b16 %v1020
      %v1217 = vunpack.c.l.b16 %v1021
      %v1218 = vunpack.c.h.b16 %v1021
      %v1219 = vunpack.c.l.b16 %v1022
      %v1220 = vunpack.c.h.b16 %v1022
      %v1221 = vpack.c.b16 %v1095, %v1093
      %v1222 = vpack.c.b16 %v1096, %v1094
      %v1223 = vpack.c.b16 %v1099, %v1097
      %v1224 = vpack.c.b16 %v1100, %v1098
      %v1225 = vpack.c.b16 %v1103, %v1101
      %v1226 = vpack.c.b16 %v1104, %v1102
      %v1227 = vpack.c.b16 %v1107, %v1105
      %v1228 = vpack.c.b16 %v1108, %v1106
      %v1229 = vpack.c.b16 %v1111, %v1109
      %v1230 = vpack.c.b16 %v1112, %v1110
      %v1231 = vpack.c.b16 %v1115, %v1113
      %v1232 = vpack.c.b16 %v1116, %v1114
      %v1233 = vpack.c.b16 %v1119, %v1117
      %v1234 = vpack.c.b16 %v1120, %v1118
      %v1235 = vpack.c.b16 %v1123, %v1121
      %v1236 = vpack.c.b16 %v1124, %v1122
      %v1237 = vpack.c.b16 %v1127, %v1125
      %v1238 = vpack.c.b16 %v1128, %v1126
      %v1239 = vpack.c.b16 %v1131, %v1129
      %v1240 = vpack.c.b16 %v1132, %v1130
      %v1241 = vpack.c.b16 %v1135, %v1133
      %v1242 = vpack.c.b16 %v1136, %v1134
      %v1243 = vpack.c.b16 %v1139, %v1137
      %v1244 = vpack.c.b16 %v1140, %v1138
      %v1245 = vpack.c.b16 %v1143, %v1141
      %v1246 = vpack.c.b16 %v1144, %v1142
      %v1247 = vpack.c.b16 %v1147, %v1145
      %v1248 = vpack.c.b16 %v1148, %v1146
      %v1249 = vpack.c.b16 %v1151, %v1149
      %v1250 = vpack.c.b16 %v1152, %v1150
      %v1251 = vpack.c.b16 %v1155, %v1153
      %v1252 = vpack.c.b16 %v1156, %v1154
      %v1253 = vpack.c.b16 %v1159, %v1157
      %v1254 = vpack.c.b16 %v1160, %v1158
      %v1255 = vpack.c.b16 %v1163, %v1161
      %v1256 = vpack.c.b16 %v1164, %v1162
      %v1257 = vpack.c.b16 %v1167, %v1165
      %v1258 = vpack.c.b16 %v1168, %v1166
      %v1259 = vpack.c.b16 %v1171, %v1169
      %v1260 = vpack.c.b16 %v1172, %v1170
      %v1261 = vpack.c.b16 %v1175, %v1173
      %v1262 = vpack.c.b16 %v1176, %v1174
      %v1263 = vpack.c.b16 %v1179, %v1177
      %v1264 = vpack.c.b16 %v1180, %v1178
      %v1265 = vpack.c.b16 %v1183, %v1181
      %v1266 = vpack.c.b16 %v1184, %v1182
      %v1267 = vpack.c.b16 %v1187, %v1185
      %v1268 = vpack.c.b16 %v1188, %v1186
      %v1269 = vpack.c.b16 %v1191, %v1189
      %v1270 = vpack.c.b16 %v1192, %v1190
      %v1271 = vpack.c.b16 %v1195, %v1193
      %v1272 = vpack.c.b16 %v1196, %v1194
      %v1273 = vpack.c.b16 %v1199, %v1197
      %v1274 = vpack.c.b16 %v1200, %v1198
      %v1275 = vpack.c.b16 %v1203, %v1201
      %v1276 = vpack.c.b16 %v1204, %v1202
      %v1277 = vpack.c.b16 %v1207, %v1205
      %v1278 = vpack.c.b16 %v1208, %v1206
      %v1279 = vpack.c.b16 %v1211, %v1209
      %v1280 = vpack.c.b16 %v1212, %v1210
      %v1281 = vpack.c.b16 %v1215, %v1213
      %v1282 = vpack.c.b16 %v1216, %v1214
      %v1283 = vpack.c.b16 %v1219, %v1217
      %v1284 = vpack.c.b16 %v1220, %v1218
      %1349 = vmatpush.bf16.msra.mxu0 %v1235
      %1350 = vmatpush.bf16.msra.mxu0 %v1233
      %1351 = vmatpush.bf16.msra.mxu0 %v1231
      %1352 = vmatpush.bf16.msra.mxu0 %v1229
      %1353 = vmatpush.bf16.msra.mxu0 %v1227
      %1354 = vmatpush.bf16.msra.mxu0 %v1225
      %1355 = vmatpush.bf16.msra.mxu0 %v1223
      %1356 = vmatpush.bf16.msra.mxu0 %v1221
      %1357 = vmatmul.bf16.gmra.mxu0 %v955
      %v1358 = vpop.f32.mrf.mxu0
      %v1359 = vadd.f32 %v1025, %v1358
      %v1360 = vpop.f32.mrf.mxu0
      %v1361 = vadd.f32 %v1025, %v1360
      %1362 = vdwg.mxu0
      %1363 = vmatpush.bf16.msra.mxu0 %v1251
      %1364 = vmatpush.bf16.msra.mxu0 %v1249
      %1365 = vmatpush.bf16.msra.mxu0 %v1247
      %1366 = vmatpush.bf16.msra.mxu0 %v1245
      %1367 = vmatpush.bf16.msra.mxu0 %v1243
      %1368 = vmatpush.bf16.msra.mxu0 %v1241
      %1369 = vmatpush.bf16.msra.mxu0 %v1239
      %1370 = vmatpush.bf16.msra.mxu0 %v1237
      %1371 = vmatmul.bf16.gmra.mxu0 %v956
      %v1372 = vpop.f32.mrf.mxu0
      %v1373 = vadd.f32 %v1359, %v1372
      %v1374 = vpop.f32.mrf.mxu0
      %v1375 = vadd.f32 %v1361, %v1374
      %1376 = vdwg.mxu0
      %1377 = vmatpush.bf16.msra.mxu0 %v1267
      %1378 = vmatpush.bf16.msra.mxu0 %v1265
      %1379 = vmatpush.bf16.msra.mxu0 %v1263
      %1380 = vmatpush.bf16.msra.mxu0 %v1261
      %1381 = vmatpush.bf16.msra.mxu0 %v1259
      %1382 = vmatpush.bf16.msra.mxu0 %v1257
      %1383 = vmatpush.bf16.msra.mxu0 %v1255
      %1384 = vmatpush.bf16.msra.mxu0 %v1253
      %1385 = vmatmul.bf16.gmra.mxu0 %v957
      %v1386 = vpop.f32.mrf.mxu0
      %v1387 = vadd.f32 %v1373, %v1386
      %v1388 = vpop.f32.mrf.mxu0
      %v1389 = vadd.f32 %v1375, %v1388
      %1390 = vdwg.mxu0
      %1391 = vmatpush.bf16.msra.mxu0 %v1283
      %1392 = vmatpush.bf16.msra.mxu0 %v1281
      %1393 = vmatpush.bf16.msra.mxu0 %v1279
      %1394 = vmatpush.bf16.msra.mxu0 %v1277
      %1395 = vmatpush.bf16.msra.mxu0 %v1275
      %1396 = vmatpush.bf16.msra.mxu0 %v1273
      %1397 = vmatpush.bf16.msra.mxu0 %v1271
      %1398 = vmatpush.bf16.msra.mxu0 %v1269
      %1399 = vmatmul.bf16.gmra.mxu0 %v958
      %v1400 = vpop.f32.mrf.mxu0
      %v1401 = vadd.f32 %v1387, %v1400
      %v1402 = vpop.f32.mrf.mxu0
      %v1403 = vadd.f32 %v1389, %v1402
      %1404 = vdwg.mxu0
      %1405 = vmatpush.bf16.msra.mxu0 %v1236
      %1406 = vmatpush.bf16.msra.mxu0 %v1234
      %1407 = vmatpush.bf16.msra.mxu0 %v1232
      %1408 = vmatpush.bf16.msra.mxu0 %v1230
      %1409 = vmatpush.bf16.msra.mxu0 %v1228
      %1410 = vmatpush.bf16.msra.mxu0 %v1226
      %1411 = vmatpush.bf16.msra.mxu0 %v1224
      %1412 = vmatpush.bf16.msra.mxu0 %v1222
      %1413 = vmatmul.bf16.gmra.mxu0 %v955
      %v1414 = vpop.f32.mrf.mxu0
      %v1415 = vadd.f32 %v1026, %v1414
      %v1416 = vpop.f32.mrf.mxu0
      %v1417 = vadd.f32 %v1026, %v1416
      %1418 = vdwg.mxu0
      %1419 = vmatpush.bf16.msra.mxu0 %v1252
      %1420 = vmatpush.bf16.msra.mxu0 %v1250
      %1421 = vmatpush.bf16.msra.mxu0 %v1248
      %1422 = vmatpush.bf16.msra.mxu0 %v1246
      %1423 = vmatpush.bf16.msra.mxu0 %v1244
      %1424 = vmatpush.bf16.msra.mxu0 %v1242
      %1425 = vmatpush.bf16.msra.mxu0 %v1240
      %1426 = vmatpush.bf16.msra.mxu0 %v1238
      %1427 = vmatmul.bf16.gmra.mxu0 %v956
      %v1428 = vpop.f32.mrf.mxu0
      %v1429 = vadd.f32 %v1415, %v1428
      %v1430 = vpop.f32.mrf.mxu0
      %v1431 = vadd.f32 %v1417, %v1430
      %1432 = vdwg.mxu0
      %1433 = vmatpush.bf16.msra.mxu0 %v1268
      %1434 = vmatpush.bf16.msra.mxu0 %v1266
      %1435 = vmatpush.bf16.msra.mxu0 %v1264
      %1436 = vmatpush.bf16.msra.mxu0 %v1262
      %1437 = vmatpush.bf16.msra.mxu0 %v1260
      %1438 = vmatpush.bf16.msra.mxu0 %v1258
      %1439 = vmatpush.bf16.msra.mxu0 %v1256
      %1440 = vmatpush.bf16.msra.mxu0 %v1254
      %1441 = vmatmul.bf16.gmra.mxu0 %v957
      %v1442 = vpop.f32.mrf.mxu0
      %v1443 = vadd.f32 %v1429, %v1442
      %v1444 = vpop.f32.mrf.mxu0
      %v1445 = vadd.f32 %v1431, %v1444
      %1446 = vdwg.mxu0
      %1447 = vmatpush.bf16.msra.mxu0 %v1284
      %1448 = vmatpush.bf16.msra.mxu0 %v1282
      %1449 = vmatpush.bf16.msra.mxu0 %v1280
      %1450 = vmatpush.bf16.msra.mxu0 %v1278
      %1451 = vmatpush.bf16.msra.mxu0 %v1276
      %1452 = vmatpush.bf16.msra.mxu0 %v1274
      %1453 = vmatpush.bf16.msra.mxu0 %v1272
      %1454 = vmatpush.bf16.msra.mxu0 %v1270
      %1455 = vmatmul.bf16.gmra.mxu0 %v958
      %v1456 = vpop.f32.mrf.mxu0
      %v1457 = vadd.f32 %v1443, %v1456
      %v1458 = vpop.f32.mrf.mxu0
      %v1459 = vadd.f32 %v1445, %v1458
      %1460 = vdwg.mxu0
      %v1461 = vxor.u32 %v1401, 2147483648
      %v1462 = vxor.u32 %v1457, 2147483648
      %v1463 = vxor.u32 %v1403, 2147483648
      %v1464 = vxor.u32 %v1459, 2147483648
      %v1465 = vmul.f32 %v1461, 1.442695
      %v1466 = vpow.pop %v1465
      %v1467 = vmul.f32 %v1462, 1.442695
      %v1468 = vpow.pop %v1467
      %v1469 = vmul.f32 %v1463, 1.442695
      %v1470 = vpow.pop %v1469
      %v1471 = vmul.f32 %v1464, 1.442695
      %v1472 = vpow.pop %v1471
      %v1473 = vadd.f32 %v1466, 1.0
      %v1474 = vadd.f32 %v1468, 1.0
      %v1475 = vadd.f32 %v1470, 1.0
      %v1476 = vadd.f32 %v1472, 1.0
      %v1477 = vrcp.pop %v1473
      %v1478 = vmul.f32 %v1473, %v1477
      %v1479 = vsub.f32 1.0, %v1478
      %v1480 = vmul.f32 %v1477, %v1479
      %v1481 = vadd.f32 %v1477, %v1480
      %vm1482 = vweird.f32 %v1473
      %vm1483 = vweird.f32 %v1477
      %vm1484 = vmor %vm1482, %vm1483
      %v1485 = vsel %vm1484, %v1477, %v1481
      %v1486 = vand.u32 2147483647, %v1473
      %vm1487 = vcmp.eq.f32.partialorder %v1486, 8.507059e+37
      %v1488 = vand.u32 %v1473, 2147483648
      %v1489 = vor.u32 1.1754944e-38, %v1488
      %v1490 = vsel %vm1487, %v1489, %v1485
      %v1491 = vmul.f32 1.0, %v1490
      %v1492 = vrcp.pop %v1474
      %v1493 = vmul.f32 %v1474, %v1492
      %v1494 = vsub.f32 1.0, %v1493
      %v1495 = vmul.f32 %v1492, %v1494
      %v1496 = vadd.f32 %v1492, %v1495
      %vm1497 = vweird.f32 %v1474
      %vm1498 = vweird.f32 %v1492
      %vm1499 = vmor %vm1497, %vm1498
      %v1500 = vsel %vm1499, %v1492, %v1496
      %v1501 = vand.u32 2147483647, %v1474
      %vm1502 = vcmp.eq.f32.partialorder %v1501, 8.507059e+37
      %v1503 = vand.u32 %v1474, 2147483648
      %v1504 = vor.u32 1.1754944e-38, %v1503
      %v1505 = vsel %vm1502, %v1504, %v1500
      %v1506 = vmul.f32 1.0, %v1505
      %v1507 = vrcp.pop %v1475
      %v1508 = vmul.f32 %v1475, %v1507
      %v1509 = vsub.f32 1.0, %v1508
      %v1510 = vmul.f32 %v1507, %v1509
      %v1511 = vadd.f32 %v1507, %v1510
      %vm1512 = vweird.f32 %v1475
      %vm1513 = vweird.f32 %v1507
      %vm1514 = vmor %vm1512, %vm1513
      %v1515 = vsel %vm1514, %v1507, %v1511
      %v1516 = vand.u32 2147483647, %v1475
      %vm1517 = vcmp.eq.f32.partialorder %v1516, 8.507059e+37
      %v1518 = vand.u32 %v1475, 2147483648
      %v1519 = vor.u32 1.1754944e-38, %v1518
      %v1520 = vsel %vm1517, %v1519, %v1515
      %v1521 = vmul.f32 1.0, %v1520
      %v1522 = vrcp.pop %v1476
      %v1523 = vmul.f32 %v1476, %v1522
      %v1524 = vsub.f32 1.0, %v1523
      %v1525 = vmul.f32 %v1522, %v1524
      %v1526 = vadd.f32 %v1522, %v1525
      %vm1527 = vweird.f32 %v1476
      %vm1528 = vweird.f32 %v1522
      %vm1529 = vmor %vm1527, %vm1528
      %v1530 = vsel %vm1529, %v1522, %v1526
      %v1531 = vand.u32 2147483647, %v1476
      %vm1532 = vcmp.eq.f32.partialorder %v1531, 8.507059e+37
      %v1533 = vand.u32 %v1476, 2147483648
      %v1534 = vor.u32 1.1754944e-38, %v1533
      %v1535 = vsel %vm1532, %v1534, %v1530
      %v1536 = vmul.f32 1.0, %v1535
      %v1537 = vpack.c.bf16 %v1521, %v1491
      %v1538 = vpack.c.bf16 %v1536, %v1506
      %v1539 = vld [vmem:[%s5] sm:$0xf]
      %v1540 = vld [vmem:[%s5 + $0x4] sm:$0xf]
      %v1541 = vld [vmem:[%s5 + $0x8] sm:$0xf]
      %v1542 = vld [vmem:[%s5 + $0xc] sm:$0xf]
      %v1543 = vld [vmem:[%s5 + $0x10] sm:$0xf]
      %v1544 = vld [vmem:[%s5 + $0x14] sm:$0xf]
      %v1545 = vld [vmem:[%s5 + $0x18] sm:$0xf]
      %v1546 = vld [vmem:[%s5 + $0x1c] sm:$0xf]
      %v1547 = vld [vmem:[%s5 + $0x20] sm:$0xf]
      %v1548 = vld [vmem:[%s5 + $0x24] sm:$0xf]
      %v1549 = vld [vmem:[%s5 + $0x28] sm:$0xf]
      %v1550 = vld [vmem:[%s5 + $0x2c] sm:$0xf]
      %v1551 = vld [vmem:[%s5 + $0x30] sm:$0xf]
      %v1552 = vld [vmem:[%s5 + $0x34] sm:$0xf]
      %v1553 = vld [vmem:[%s5 + $0x38] sm:$0xf]
      %v1554 = vld [vmem:[%s5 + $0x3c] sm:$0xf]
      %v1555 = vld [vmem:[%s5 + $0x40] sm:$0xf]
      %v1556 = vld [vmem:[%s5 + $0x44] sm:$0xf]
      %v1557 = vld [vmem:[%s5 + $0x48] sm:$0xf]
      %v1558 = vld [vmem:[%s5 + $0x4c] sm:$0xf]
      %v1559 = vld [vmem:[%s5 + $0x50] sm:$0xf]
      %v1560 = vld [vmem:[%s5 + $0x54] sm:$0xf]
      %v1561 = vld [vmem:[%s5 + $0x58] sm:$0xf]
      %v1562 = vld [vmem:[%s5 + $0x5c] sm:$0xf]
      %v1563 = vld [vmem:[%s5 + $0x60] sm:$0xf]
      %v1564 = vld [vmem:[%s5 + $0x64] sm:$0xf]
      %v1565 = vld [vmem:[%s5 + $0x68] sm:$0xf]
      %v1566 = vld [vmem:[%s5 + $0x6c] sm:$0xf]
      %v1567 = vld [vmem:[%s5 + $0x70] sm:$0xf]
      %v1568 = vld [vmem:[%s5 + $0x74] sm:$0xf]
      %v1569 = vld [vmem:[%s5 + $0x78] sm:$0xf]
      %v1570 = vld [vmem:[%s5 + $0x7c] sm:$0xf]
      %v1571 = vld [vmem:[%s6] sm:$0x1]
      %v1573 = vperm.slane %v1571, 0
      %v1607 = vunpack.c.l.b16 %v1539
      %v1608 = vunpack.c.l.b16 %v1540
      %v1609 = vunpack.c.l.b16 %v1541
      %v1610 = vunpack.c.l.b16 %v1542
      %v1611 = vunpack.c.l.b16 %v1543
      %v1612 = vunpack.c.l.b16 %v1544
      %v1613 = vunpack.c.l.b16 %v1545
      %v1614 = vunpack.c.l.b16 %v1546
      %v1615 = vunpack.c.l.b16 %v1547
      %v1616 = vunpack.c.l.b16 %v1548
      %v1617 = vunpack.c.l.b16 %v1549
      %v1618 = vunpack.c.l.b16 %v1550
      %v1619 = vunpack.c.l.b16 %v1551
      %v1620 = vunpack.c.l.b16 %v1552
      %v1621 = vunpack.c.l.b16 %v1553
      %v1622 = vunpack.c.l.b16 %v1554
      %v1623 = vunpack.c.l.b16 %v1555
      %v1624 = vunpack.c.l.b16 %v1556
      %v1625 = vunpack.c.l.b16 %v1557
      %v1626 = vunpack.c.l.b16 %v1558
      %v1627 = vunpack.c.l.b16 %v1559
      %v1628 = vunpack.c.l.b16 %v1560
      %v1629 = vunpack.c.l.b16 %v1561
      %v1630 = vunpack.c.l.b16 %v1562
      %v1631 = vunpack.c.l.b16 %v1563
      %v1632 = vunpack.c.l.b16 %v1564
      %v1633 = vunpack.c.l.b16 %v1565
      %v1634 = vunpack.c.l.b16 %v1566
      %v1635 = vunpack.c.l.b16 %v1567
      %v1636 = vunpack.c.l.b16 %v1568
      %v1637 = vunpack.c.l.b16 %v1569
      %v1638 = vunpack.c.l.b16 %v1570
      %v1639 = vpack.c.b16 %v1608, %v1607
      %v1640 = vpack.c.b16 %v1610, %v1609
      %v1641 = vpack.c.b16 %v1612, %v1611
      %v1642 = vpack.c.b16 %v1614, %v1613
      %v1643 = vpack.c.b16 %v1616, %v1615
      %v1644 = vpack.c.b16 %v1618, %v1617
      %v1645 = vpack.c.b16 %v1620, %v1619
      %v1646 = vpack.c.b16 %v1622, %v1621
      %v1647 = vpack.c.b16 %v1624, %v1623
      %v1648 = vpack.c.b16 %v1626, %v1625
      %v1649 = vpack.c.b16 %v1628, %v1627
      %v1650 = vpack.c.b16 %v1630, %v1629
      %v1651 = vpack.c.b16 %v1632, %v1631
      %v1652 = vpack.c.b16 %v1634, %v1633
      %v1653 = vpack.c.b16 %v1636, %v1635
      %v1654 = vpack.c.b16 %v1638, %v1637
      %1671 = vmatpush.bf16.msra.mxu0 %v1646
      %1672 = vmatpush.bf16.msra.mxu0 %v1645
      %1673 = vmatpush.bf16.msra.mxu0 %v1644
      %1674 = vmatpush.bf16.msra.mxu0 %v1643
      %1675 = vmatpush.bf16.msra.mxu0 %v1642
      %1676 = vmatpush.bf16.msra.mxu0 %v1641
      %1677 = vmatpush.bf16.msra.mxu0 %v1640
      %1678 = vmatpush.bf16.msra.mxu0 %v1639
      %1679 = vmatmul.bf16.gmra.mxu0 %v1537
      %v1680 = vpop.f32.mrf.mxu0
      %v1681 = vadd.f32 %v1573, %v1680
      %v1682 = vpop.f32.mrf.mxu0
      %v1683 = vadd.f32 %v1573, %v1682
      %1684 = vdwg.mxu0
      %1685 = vmatpush.bf16.msra.mxu0 %v1654
      %1686 = vmatpush.bf16.msra.mxu0 %v1653
      %1687 = vmatpush.bf16.msra.mxu0 %v1652
      %1688 = vmatpush.bf16.msra.mxu0 %v1651
      %1689 = vmatpush.bf16.msra.mxu0 %v1650
      %1690 = vmatpush.bf16.msra.mxu0 %v1649
      %1691 = vmatpush.bf16.msra.mxu0 %v1648
      %1692 = vmatpush.bf16.msra.mxu0 %v1647
      %1693 = vmatmul.bf16.gmra.mxu0 %v1538
      %v1694 = vpop.f32.mrf.mxu0
      %v1695 = vadd.f32 %v1681, %v1694
      %v1696 = vpop.f32.mrf.mxu0
      %v1697 = vadd.f32 %v1683, %v1696
      %1698 = vdwg.mxu0
      %v1699 = vxor.u32 %v1695, 2147483648
      %v1700 = vxor.u32 %v1697, 2147483648
      %v1701 = vmul.f32 %v1699, 1.442695
      %v1702 = vpow.pop %v1701
      %v1703 = vmul.f32 %v1700, 1.442695
      %v1704 = vpow.pop %v1703
      %v1705 = vadd.f32 %v1702, 1.0
      %v1706 = vadd.f32 %v1704, 1.0
      %v1707 = vrcp.pop %v1705
      %v1708 = vmul.f32 %v1705, %v1707
      %v1709 = vsub.f32 1.0, %v1708
      %v1710 = vmul.f32 %v1707, %v1709
      %v1711 = vadd.f32 %v1707, %v1710
      %vm1712 = vweird.f32 %v1705
      %vm1713 = vweird.f32 %v1707
      %vm1714 = vmor %vm1712, %vm1713
      %v1715 = vsel %vm1714, %v1707, %v1711
      %v1716 = vand.u32 2147483647, %v1705
      %vm1717 = vcmp.eq.f32.partialorder %v1716, 8.507059e+37
      %v1718 = vand.u32 %v1705, 2147483648
      %v1719 = vor.u32 1.1754944e-38, %v1718
      %v1720 = vsel %vm1717, %v1719, %v1715
      %v1721 = vmul.f32 1.0, %v1720
      %v1722 = vrcp.pop %v1706
      %v1723 = vmul.f32 %v1706, %v1722
      %v1724 = vsub.f32 1.0, %v1723
      %v1725 = vmul.f32 %v1722, %v1724
      %v1726 = vadd.f32 %v1722, %v1725
      %vm1727 = vweird.f32 %v1706
      %vm1728 = vweird.f32 %v1722
      %vm1729 = vmor %vm1727, %vm1728
      %v1730 = vsel %vm1729, %v1722, %v1726
      %v1731 = vand.u32 2147483647, %v1706
      %vm1732 = vcmp.eq.f32.partialorder %v1731, 8.507059e+37
      %v1733 = vand.u32 %v1706, 2147483648
      %v1734 = vor.u32 1.1754944e-38, %v1733
      %v1735 = vsel %vm1732, %v1734, %v1730
      %v1736 = vmul.f32 1.0, %v1735
      %1737 = vst [vmem:[%s283] sm:$0xff] %v1721
      %1738 = vst [vmem:[%s283 + $0x8] sm:$0xff] %v1736
      %s1739 = smul.u32 2, %s18
      %p1740 = scmp.lt.s32.totalorder %s1739, 3
      %s1741 = scalar_select %p1740, %s1739, 3
      %s1742 = smul.addr %s1741, 8
      %s1743 = scalar_lea.vmem %s7, %s1742
      // Predicated region
      $region49: #{mlp_forward.1} parent=47 // pred_check
        %p1744 = pneg %p188
      $region50: #{mlp_forward.1} parent=47 // pred_check_branch
        %1746 = sbr.rel (%p1744) target = $region52
      $region51: #{mlp_forward.1} parent=47 // pred_region
        %s1747 = smul.u32 2, %s18
      $region52: #{mlp_forward.1} parent=47 // pred_fallthru
        _
    $region48: #{mlp_forward.1} parent=5 // pred_fallthru
      _
    %p1748 = scmp.le.s32.totalorder 2, %s13
    // Predicated region
    $region53: #{mlp_forward.1} parent=5 // pred_check
      %p1749 = pneg %p1748
    $region54: #{mlp_forward.1} parent=5 // pred_check_branch
      %1751 = sbr.rel (%p1749) target = $region56
    $region55: #{mlp_forward.1} parent=5 // pred_region
      %s1752 = ssub.s32 %s13, 2
      // Predicated region
      $region57: #{mlp_forward.1} parent=55 // pred_check
        %p1753 = pneg %p194
      $region58: #{mlp_forward.1} parent=55 // pred_check_branch
        %1755 = sbr.rel (%p1753) target = $region60
      $region59: #{mlp_forward.1} parent=55 // pred_region
        %s1756 = smul.u32 2, %s19
        %p1757 = scmp.lt.s32.totalorder %s1756, 3
        %s1758 = scalar_select %p1757, %s1756, 3
        %s1759 = smul.addr %s1758, 8
        %s1760 = scalar_lea.vmem %s7, %s1759
      $region60: #{mlp_forward.1} parent=55 // pred_fallthru
        _
    $region56: #{mlp_forward.1} parent=5 // pred_fallthru
      _
  $region6: #{mlp_forward.1} parent=0 // loop_footer
    %s17 = sadd.s32 1, %s13
  $region7: #{mlp_forward.1} parent=0 // loop_footer_branch
    %12 = sbr.rel target = $region3
  $region8: #{mlp_forward.1} parent=0 // loop_exit
    _

</llo_original>
